<compile_context>
chip_gen: v7x
topology: tpu7x:2x2x1
jax: 0.10.0
libtpu: 0.0.40
codegen_flags: <defaults>
</compile_context>

<pallas_src>
import functools

import jax
import jax.numpy as jnp
from jax.experimental import pallas as pl
from jax.experimental.pallas import tpu as pltpu

LEAKY_SLOPE = 0.2  # PyG GATConv default negative_slope


def _pick_dst_tile(n, max_tile=256):
    """Destination-row tile: full N when small, else a multiple of 16 dividing N."""
    if n <= max_tile:
        return n
    t = max_tile - (max_tile % 16)
    while t >= 16:
        if n % t == 0:
            return t
        t -= 16
    return n


def gat_conv_kernel(x_ref, xt_ref, xdst_ref, adj_ref, w_ref, wasrc_ref, wadst_ref,
                    b_ref, out_ref, *, heads, d, apply_act):
    """One destination-row tile per grid step; all heads fused inside."""
    f32 = jnp.float32
    bf16 = jnp.bfloat16

    # Fused projection for ALL heads: (N, F_in) @ (F_in, heads*D)  -- bf16 MXU, f32 acc.
    h_all = jnp.dot(x_ref[...], w_ref[...], preferred_element_type=f32)   # (N, H*D)
    h_all_bf = h_all.astype(bf16)

    # Attention score vectors, already oriented for broadcasting into (TILE, N):
    #   alpha_src: (heads, N)   = (W_h a_src_h)^T x^T     (lane-major over sources)
    #   alpha_dst: (TILE, heads) = x_dst (W_h a_dst_h)    (sublane-major over dests)
    alpha_src = jnp.dot(wasrc_ref[...], xt_ref[...], preferred_element_type=f32)
    alpha_dst = jnp.dot(xdst_ref[...], wadst_ref[...], preferred_element_type=f32)

    adj = adj_ref[...].astype(f32)                                        # (TILE, N)
    bias = b_ref[...]                                                     # (1, H*D)

    head_outs = []
    for hd in range(heads):  # short static unroll over heads
        # e[i, j] = LeakyReLU(alpha_dst[i] + alpha_src[j]) for message j -> i
        e = alpha_dst[:, hd:hd + 1] + alpha_src[hd:hd + 1, :]             # (TILE, N)
        e = jnp.where(e > 0, e, LEAKY_SLOPE * e)

        # Masked softmax over source neighbours. The global row-max is a valid shift
        # (it cancels between numerator and denominator), so a single `* adj` multiply
        # is sufficient -- no NEG_INF select needed.
        e = e - jnp.max(e, axis=-1, keepdims=True)
        p = jnp.exp(e) * adj
        denom = jnp.sum(p, axis=-1, keepdims=True)
        inv = pl.reciprocal(jnp.maximum(denom, 1e-30), approx=True)       # EUP slot
        attn = (p * inv).astype(bf16)

        # Aggregate: out[i] = sum_j attn[i, j] * h[j]   (bf16 MXU, f32 acc)
        head_outs.append(
            jnp.dot(attn, h_all_bf[:, hd * d:(hd + 1) * d],
                    preferred_element_type=f32)
        )

    out = jnp.concatenate(head_outs, axis=-1) + bias                      # (TILE, H*D)
    if apply_act:  # fused ELU epilogue (all but the last layer)
        out = jnp.where(out > 0, out, jnp.exp(jnp.minimum(out, 0.0)) - 1.0)
    out_ref[...] = out.astype(out_ref.dtype)


def gat_conv(x, adj_bf16, w, a_src, a_dst, bias, *, apply_act):
    """One GATConv layer (concat=True across heads), output (N, heads*D) f32."""
    n, f_in = x.shape
    heads, _, d = w.shape
    tile = _pick_dst_tile(n)

    # Tiny per-layer parameter re-layouts (pure XLA, computed once per layer):
    w2d = jnp.transpose(w, (1, 0, 2)).reshape(f_in, heads * d)            # (F_in, H*D)
    wa_src = jnp.einsum('hfd,hd->hf', w, a_src[:, 0, :])                  # (heads, F_in)
    wa_dst = jnp.einsum('hfd,hd->fh', w, a_dst[:, 0, :])                  # (F_in, heads)
    bias2d = bias.reshape(1, heads * d).astype(jnp.float32)

    bf16 = jnp.bfloat16
    x_bf = x.astype(bf16)
    xt_bf = jnp.transpose(x).astype(bf16)                                 # (F_in, N)

    kernel = functools.partial(gat_conv_kernel, heads=heads, d=d, apply_act=apply_act)
    return pl.pallas_call(
        kernel,
        out_shape=jax.ShapeDtypeStruct((n, heads * d), jnp.float32),
        grid=(n // tile,),
        in_specs=[
            pl.BlockSpec((n, f_in), lambda i: (0, 0)),          # x (sources, full)
            pl.BlockSpec((f_in, n), lambda i: (0, 0)),          # x^T (full)
            pl.BlockSpec((tile, f_in), lambda i: (i, 0)),       # x (dst rows, tiled)
            pl.BlockSpec((tile, n), lambda i: (i, 0)),          # adj rows (tiled, bf16)
            pl.BlockSpec((f_in, heads * d), lambda i: (0, 0)),  # fused W
            pl.BlockSpec((heads, f_in), lambda i: (0, 0)),      # W a_src (per head)
            pl.BlockSpec((f_in, heads), lambda i: (0, 0)),      # W a_dst (per head)
            pl.BlockSpec((1, heads * d), lambda i: (0, 0)),     # bias
        ],
        out_specs=pl.BlockSpec((tile, heads * d), lambda i: (i, 0)),
        compiler_params=pltpu.CompilerParams(
            dimension_semantics=("parallel",),
            vmem_limit_bytes=48 * 1024 * 1024,
        ),
    )(x_bf, xt_bf, x_bf, adj_bf16,
      w2d.astype(bf16), wa_src.astype(bf16), wa_dst.astype(bf16), bias2d)


def init_gat_params(key, in_channels, hidden_channels, out_channels, num_layers, heads):
    """Deterministic synthetic parameters matching the GAT layer stack."""
    layer_specs = [(in_channels, hidden_channels, heads)]
    for _ in range(num_layers - 2):
        layer_specs.append((hidden_channels * heads, hidden_channels, heads))
    layer_specs.append((hidden_channels * heads, out_channels, 1))  # final: single head

    params = []
    for f_in, d, h in layer_specs:
        key, k1, k2, k3 = jax.random.split(key, 4)
        scale = (2.0 / (f_in + d)) ** 0.5
        w = jax.random.normal(k1, (h, f_in, d), jnp.float32) * scale
        a_s = jax.random.normal(k2, (h, 1, d), jnp.float32) * scale
        a_d = jax.random.normal(k3, (h, 1, d), jnp.float32) * scale
        b = jnp.zeros((h * d,), jnp.float32)
        params.append((w, a_s, a_d, b))
    return params


@jax.jit
def gat_forward(params, x, adj):
    """Mirrors GAT.forward: activation(conv(x)) for all but the last layer.

    ELU + bias are fused inside the kernel epilogue; adjacency is cast to bf16 once
    for the whole layer stack."""
    adj_bf = adj.astype(jnp.bfloat16)
    for w, a_s, a_d, b in params[:-1]:
        x = gat_conv(x, adj_bf, w, a_s, a_d, b, apply_act=True)
    w, a_s, a_d, b = params[-1]
    return gat_conv(x, adj_bf, w, a_s, a_d, b, apply_act=False)


def edge_index_to_adj(edge_index, num_nodes):
    """Dense adjacency mask adj[dst, src] = 1.0 plus self-loops (PyG add_self_loops=True)."""
    src, dst = edge_index
    adj = jnp.zeros((num_nodes, num_nodes), jnp.float32)
    adj = adj.at[dst, src].set(1.0)
    idx = jnp.arange(num_nodes)
    adj = adj.at[idx, idx].set(1.0)
    return adj


if __name__ == "__main__":
    # small shapes consistent with a node-classification GAT
    num_nodes = 16
    in_channels = 16
    hidden_channels = 16
    out_channels = 8
    num_layers = 3
    heads = 4

    key = jax.random.PRNGKey(0)
    kx, ke, kp = jax.random.split(key, 3)

    # node features
    x = jax.random.normal(kx, (num_nodes, in_channels), jnp.float32)

    # deterministic edge_index: ring graph + a few extra random edges, shape (2, E)
    ring_src = jnp.arange(num_nodes, dtype=jnp.int32)
    ring_dst = (ring_src + 1) % num_nodes
    extra = jax.random.randint(ke, (2, 12), 0, num_nodes, dtype=jnp.int32)
    edge_index = jnp.concatenate([jnp.stack([ring_src, ring_dst]), extra], axis=1)

    adj = edge_index_to_adj(edge_index, num_nodes)
    params = init_gat_params(
        kp, in_channels, hidden_channels, out_channels, num_layers, heads
    )

    out = gat_forward(params, x, adj)
    out = jax.block_until_ready(out)
    assert out.shape == (num_nodes, out_channels)
    assert bool(jnp.all(jnp.isfinite(out)))
    print("KERNEL_OK")
</pallas_src>

<mosaic_0001>
module attributes {stable_mosaic.version = 11 : i64} {
  func.func @gat_conv_kernel(%arg0: i32, %arg1: memref<16x16xbf16, #tpu.memory_space<vmem>>, %arg2: memref<16x16xbf16, #tpu.memory_space<vmem>>, %arg3: memref<16x16xbf16, #tpu.memory_space<vmem>>, %arg4: memref<16x16xbf16, #tpu.memory_space<vmem>>, %arg5: memref<16x64xbf16, #tpu.memory_space<vmem>>, %arg6: memref<4x16xbf16, #tpu.memory_space<vmem>>, %arg7: memref<16x4xbf16, #tpu.memory_space<vmem>>, %arg8: memref<1x64xf32, #tpu.memory_space<vmem>>, %arg9: memref<16x64xf32, #tpu.memory_space<vmem>>) attributes {dimension_semantics = [#tpu.dimension_semantics<parallel>], iteration_bounds = array<i64: 1>, scalar_prefetch = 0 : i64, scratch_operands = 0 : i64, tpu.core_type = #tpu.core_type<tc>, window_params = [{pipeline_mode = #tpu.pipeline_mode<synchronous>, transform_indices = @transform_0, window_bounds = array<i64: 16, 16>}, {pipeline_mode = #tpu.pipeline_mode<synchronous>, transform_indices = @transform_1, window_bounds = array<i64: 16, 16>}, {transform_indices = @transform_2, window_bounds = array<i64: 16, 16>}, {transform_indices = @transform_3, window_bounds = array<i64: 16, 16>}, {pipeline_mode = #tpu.pipeline_mode<synchronous>, transform_indices = @transform_4, window_bounds = array<i64: 16, 64>}, {pipeline_mode = #tpu.pipeline_mode<synchronous>, transform_indices = @transform_5, window_bounds = array<i64: 4, 16>}, {pipeline_mode = #tpu.pipeline_mode<synchronous>, transform_indices = @transform_6, window_bounds = array<i64: 16, 4>}, {pipeline_mode = #tpu.pipeline_mode<synchronous>, transform_indices = @transform_7, window_bounds = array<i64: 1, 64>}, {transform_indices = @transform_8, window_bounds = array<i64: 16, 64>}]} {
    %c0 = arith.constant 0 : index
    %c0_0 = arith.constant 0 : index
    %0 = vector.load %arg1[%c0, %c0_0] : memref<16x16xbf16, #tpu.memory_space<vmem>>, vector<16x16xbf16>
    %c0_1 = arith.constant 0 : index
    %c0_2 = arith.constant 0 : index
    %1 = vector.load %arg5[%c0_1, %c0_2] : memref<16x64xbf16, #tpu.memory_space<vmem>>, vector<16x64xbf16>
    %cst = arith.constant dense<0.000000e+00> : vector<16x64xf32>
    %2 = tpu.matmul %0, %1, %cst {dimension_numbers = #tpu.dot_dimension_numbers<[1], [0], [0], [1], [0, 0, 1, 1], [], []>} : vector<16x16xbf16>, vector<16x64xbf16>, vector<16x64xf32> -> vector<16x64xf32>
    %3 = arith.truncf %2 : vector<16x64xf32> to vector<16x64xbf16>
    %c0_3 = arith.constant 0 : index
    %c0_4 = arith.constant 0 : index
    %4 = vector.load %arg6[%c0_3, %c0_4] : memref<4x16xbf16, #tpu.memory_space<vmem>>, vector<4x16xbf16>
    %c0_5 = arith.constant 0 : index
    %c0_6 = arith.constant 0 : index
    %5 = vector.load %arg2[%c0_5, %c0_6] : memref<16x16xbf16, #tpu.memory_space<vmem>>, vector<16x16xbf16>
    %cst_7 = arith.constant dense<0.000000e+00> : vector<4x16xf32>
    %6 = tpu.matmul %4, %5, %cst_7 {dimension_numbers = #tpu.dot_dimension_numbers<[1], [0], [0], [1], [0, 0, 1, 1], [], []>} : vector<4x16xbf16>, vector<16x16xbf16>, vector<4x16xf32> -> vector<4x16xf32>
    %c0_8 = arith.constant 0 : index
    %c0_9 = arith.constant 0 : index
    %7 = vector.load %arg3[%c0_8, %c0_9] : memref<16x16xbf16, #tpu.memory_space<vmem>>, vector<16x16xbf16>
    %c0_10 = arith.constant 0 : index
    %c0_11 = arith.constant 0 : index
    %8 = vector.load %arg7[%c0_10, %c0_11] : memref<16x4xbf16, #tpu.memory_space<vmem>>, vector<16x4xbf16>
    %cst_12 = arith.constant dense<0.000000e+00> : vector<16x4xf32>
    %9 = tpu.matmul %7, %8, %cst_12 {dimension_numbers = #tpu.dot_dimension_numbers<[1], [0], [0], [1], [0, 0, 1, 1], [], []>} : vector<16x16xbf16>, vector<16x4xbf16>, vector<16x4xf32> -> vector<16x4xf32>
    %c0_13 = arith.constant 0 : index
    %c0_14 = arith.constant 0 : index
    %10 = vector.load %arg4[%c0_13, %c0_14] : memref<16x16xbf16, #tpu.memory_space<vmem>>, vector<16x16xbf16>
    %11 = arith.extf %10 : vector<16x16xbf16> to vector<16x16xf32>
    %c0_15 = arith.constant 0 : index
    %c0_16 = arith.constant 0 : index
    %12 = vector.load %arg8[%c0_15, %c0_16] : memref<1x64xf32, #tpu.memory_space<vmem>>, vector<1x64xf32>
    %13 = vector.extract_strided_slice %9 {offsets = [0, 0], sizes = [16, 1], strides = [1, 1]} : vector<16x4xf32> to vector<16x1xf32>
    %14 = vector.extract_strided_slice %6 {offsets = [0, 0], sizes = [1, 16], strides = [1, 1]} : vector<4x16xf32> to vector<1x16xf32>
    %15 = vector.broadcast %13 : vector<16x1xf32> to vector<16x16xf32>
    %16 = vector.broadcast %14 : vector<1x16xf32> to vector<16x16xf32>
    %17 = arith.addf %15, %16 : vector<16x16xf32>
    %cst_17 = arith.constant 0.000000e+00 : f32
    %18 = vector.broadcast %cst_17 : f32 to vector<16x16xf32>
    %19 = arith.cmpf ogt, %17, %18 : vector<16x16xf32>
    %cst_18 = arith.constant 2.000000e-01 : f32
    %20 = vector.broadcast %cst_18 : f32 to vector<16x16xf32>
    %21 = arith.mulf %20, %17 : vector<16x16xf32>
    %22 = arith.select %19, %17, %21 : vector<16x16xi1>, vector<16x16xf32>
    %cst_19 = arith.constant dense<0xFF800000> : vector<16xf32>
    %23 = vector.multi_reduction <maximumf>, %22, %cst_19 [1] : vector<16x16xf32> to vector<16xf32>
    %24 = vector.shape_cast %23 : vector<16xf32> to vector<16x1xf32>
    %25 = vector.broadcast %24 : vector<16x1xf32> to vector<16x16xf32>
    %26 = arith.subf %22, %25 : vector<16x16xf32>
    %27 = math.exp %26 : vector<16x16xf32>
    %28 = arith.mulf %27, %11 : vector<16x16xf32>
    %cst_20 = arith.constant dense<0.000000e+00> : vector<16xf32>
    %29 = vector.multi_reduction <add>, %28, %cst_20 [1] : vector<16x16xf32> to vector<16xf32>
    %30 = vector.shape_cast %29 : vector<16xf32> to vector<16x1xf32>
    %cst_21 = arith.constant 1.000000e-30 : f32
    %31 = vector.broadcast %cst_21 : f32 to vector<16x1xf32>
    %32 = arith.maximumf %30, %31 : vector<16x1xf32>
    %33 = tpu.reciprocal %32 {approx = true} : vector<16x1xf32> -> vector<16x1xf32>
    %34 = vector.broadcast %33 : vector<16x1xf32> to vector<16x16xf32>
    %35 = arith.mulf %28, %34 : vector<16x16xf32>
    %36 = arith.truncf %35 : vector<16x16xf32> to vector<16x16xbf16>
    %37 = vector.extract_strided_slice %3 {offsets = [0, 0], sizes = [16, 16], strides = [1, 1]} : vector<16x64xbf16> to vector<16x16xbf16>
    %cst_22 = arith.constant dense<0.000000e+00> : vector<16x16xf32>
    %38 = tpu.matmul %36, %37, %cst_22 {dimension_numbers = #tpu.dot_dimension_numbers<[1], [0], [0], [1], [0, 0, 1, 1], [], []>} : vector<16x16xbf16>, vector<16x16xbf16>, vector<16x16xf32> -> vector<16x16xf32>
    %39 = vector.extract_strided_slice %9 {offsets = [0, 1], sizes = [16, 1], strides = [1, 1]} : vector<16x4xf32> to vector<16x1xf32>
    %40 = vector.extract_strided_slice %6 {offsets = [1, 0], sizes = [1, 16], strides = [1, 1]} : vector<4x16xf32> to vector<1x16xf32>
    %41 = vector.broadcast %39 : vector<16x1xf32> to vector<16x16xf32>
    %42 = vector.broadcast %40 : vector<1x16xf32> to vector<16x16xf32>
    %43 = arith.addf %41, %42 : vector<16x16xf32>
    %cst_23 = arith.constant 0.000000e+00 : f32
    %44 = vector.broadcast %cst_23 : f32 to vector<16x16xf32>
    %45 = arith.cmpf ogt, %43, %44 : vector<16x16xf32>
    %cst_24 = arith.constant 2.000000e-01 : f32
    %46 = vector.broadcast %cst_24 : f32 to vector<16x16xf32>
    %47 = arith.mulf %46, %43 : vector<16x16xf32>
    %48 = arith.select %45, %43, %47 : vector<16x16xi1>, vector<16x16xf32>
    %cst_25 = arith.constant dense<0xFF800000> : vector<16xf32>
    %49 = vector.multi_reduction <maximumf>, %48, %cst_25 [1] : vector<16x16xf32> to vector<16xf32>
    %50 = vector.shape_cast %49 : vector<16xf32> to vector<16x1xf32>
    %51 = vector.broadcast %50 : vector<16x1xf32> to vector<16x16xf32>
    %52 = arith.subf %48, %51 : vector<16x16xf32>
    %53 = math.exp %52 : vector<16x16xf32>
    %54 = arith.mulf %53, %11 : vector<16x16xf32>
    %cst_26 = arith.constant dense<0.000000e+00> : vector<16xf32>
    %55 = vector.multi_reduction <add>, %54, %cst_26 [1] : vector<16x16xf32> to vector<16xf32>
    %56 = vector.shape_cast %55 : vector<16xf32> to vector<16x1xf32>
    %cst_27 = arith.constant 1.000000e-30 : f32
    %57 = vector.broadcast %cst_27 : f32 to vector<16x1xf32>
    %58 = arith.maximumf %56, %57 : vector<16x1xf32>
    %59 = tpu.reciprocal %58 {approx = true} : vector<16x1xf32> -> vector<16x1xf32>
    %60 = vector.broadcast %59 : vector<16x1xf32> to vector<16x16xf32>
    %61 = arith.mulf %54, %60 : vector<16x16xf32>
    %62 = arith.truncf %61 : vector<16x16xf32> to vector<16x16xbf16>
    %63 = vector.extract_strided_slice %3 {offsets = [0, 16], sizes = [16, 16], strides = [1, 1]} : vector<16x64xbf16> to vector<16x16xbf16>
    %cst_28 = arith.constant dense<0.000000e+00> : vector<16x16xf32>
    %64 = tpu.matmul %62, %63, %cst_28 {dimension_numbers = #tpu.dot_dimension_numbers<[1], [0], [0], [1], [0, 0, 1, 1], [], []>} : vector<16x16xbf16>, vector<16x16xbf16>, vector<16x16xf32> -> vector<16x16xf32>
    %65 = vector.extract_strided_slice %9 {offsets = [0, 2], sizes = [16, 1], strides = [1, 1]} : vector<16x4xf32> to vector<16x1xf32>
    %66 = vector.extract_strided_slice %6 {offsets = [2, 0], sizes = [1, 16], strides = [1, 1]} : vector<4x16xf32> to vector<1x16xf32>
    %67 = vector.broadcast %65 : vector<16x1xf32> to vector<16x16xf32>
    %68 = vector.broadcast %66 : vector<1x16xf32> to vector<16x16xf32>
    %69 = arith.addf %67, %68 : vector<16x16xf32>
    %cst_29 = arith.constant 0.000000e+00 : f32
    %70 = vector.broadcast %cst_29 : f32 to vector<16x16xf32>
    %71 = arith.cmpf ogt, %69, %70 : vector<16x16xf32>
    %cst_30 = arith.constant 2.000000e-01 : f32
    %72 = vector.broadcast %cst_30 : f32 to vector<16x16xf32>
    %73 = arith.mulf %72, %69 : vector<16x16xf32>
    %74 = arith.select %71, %69, %73 : vector<16x16xi1>, vector<16x16xf32>
    %cst_31 = arith.constant dense<0xFF800000> : vector<16xf32>
    %75 = vector.multi_reduction <maximumf>, %74, %cst_31 [1] : vector<16x16xf32> to vector<16xf32>
    %76 = vector.shape_cast %75 : vector<16xf32> to vector<16x1xf32>
    %77 = vector.broadcast %76 : vector<16x1xf32> to vector<16x16xf32>
    %78 = arith.subf %74, %77 : vector<16x16xf32>
    %79 = math.exp %78 : vector<16x16xf32>
    %80 = arith.mulf %79, %11 : vector<16x16xf32>
    %cst_32 = arith.constant dense<0.000000e+00> : vector<16xf32>
    %81 = vector.multi_reduction <add>, %80, %cst_32 [1] : vector<16x16xf32> to vector<16xf32>
    %82 = vector.shape_cast %81 : vector<16xf32> to vector<16x1xf32>
    %cst_33 = arith.constant 1.000000e-30 : f32
    %83 = vector.broadcast %cst_33 : f32 to vector<16x1xf32>
    %84 = arith.maximumf %82, %83 : vector<16x1xf32>
    %85 = tpu.reciprocal %84 {approx = true} : vector<16x1xf32> -> vector<16x1xf32>
    %86 = vector.broadcast %85 : vector<16x1xf32> to vector<16x16xf32>
    %87 = arith.mulf %80, %86 : vector<16x16xf32>
    %88 = arith.truncf %87 : vector<16x16xf32> to vector<16x16xbf16>
    %89 = vector.extract_strided_slice %3 {offsets = [0, 32], sizes = [16, 16], strides = [1, 1]} : vector<16x64xbf16> to vector<16x16xbf16>
    %cst_34 = arith.constant dense<0.000000e+00> : vector<16x16xf32>
    %90 = tpu.matmul %88, %89, %cst_34 {dimension_numbers = #tpu.dot_dimension_numbers<[1], [0], [0], [1], [0, 0, 1, 1], [], []>} : vector<16x16xbf16>, vector<16x16xbf16>, vector<16x16xf32> -> vector<16x16xf32>
    %91 = vector.extract_strided_slice %9 {offsets = [0, 3], sizes = [16, 1], strides = [1, 1]} : vector<16x4xf32> to vector<16x1xf32>
    %92 = vector.extract_strided_slice %6 {offsets = [3, 0], sizes = [1, 16], strides = [1, 1]} : vector<4x16xf32> to vector<1x16xf32>
    %93 = vector.broadcast %91 : vector<16x1xf32> to vector<16x16xf32>
    %94 = vector.broadcast %92 : vector<1x16xf32> to vector<16x16xf32>
    %95 = arith.addf %93, %94 : vector<16x16xf32>
    %cst_35 = arith.constant 0.000000e+00 : f32
    %96 = vector.broadcast %cst_35 : f32 to vector<16x16xf32>
    %97 = arith.cmpf ogt, %95, %96 : vector<16x16xf32>
    %cst_36 = arith.constant 2.000000e-01 : f32
    %98 = vector.broadcast %cst_36 : f32 to vector<16x16xf32>
    %99 = arith.mulf %98, %95 : vector<16x16xf32>
    %100 = arith.select %97, %95, %99 : vector<16x16xi1>, vector<16x16xf32>
    %cst_37 = arith.constant dense<0xFF800000> : vector<16xf32>
    %101 = vector.multi_reduction <maximumf>, %100, %cst_37 [1] : vector<16x16xf32> to vector<16xf32>
    %102 = vector.shape_cast %101 : vector<16xf32> to vector<16x1xf32>
    %103 = vector.broadcast %102 : vector<16x1xf32> to vector<16x16xf32>
    %104 = arith.subf %100, %103 : vector<16x16xf32>
    %105 = math.exp %104 : vector<16x16xf32>
    %106 = arith.mulf %105, %11 : vector<16x16xf32>
    %cst_38 = arith.constant dense<0.000000e+00> : vector<16xf32>
    %107 = vector.multi_reduction <add>, %106, %cst_38 [1] : vector<16x16xf32> to vector<16xf32>
    %108 = vector.shape_cast %107 : vector<16xf32> to vector<16x1xf32>
    %cst_39 = arith.constant 1.000000e-30 : f32
    %109 = vector.broadcast %cst_39 : f32 to vector<16x1xf32>
    %110 = arith.maximumf %108, %109 : vector<16x1xf32>
    %111 = tpu.reciprocal %110 {approx = true} : vector<16x1xf32> -> vector<16x1xf32>
    %112 = vector.broadcast %111 : vector<16x1xf32> to vector<16x16xf32>
    %113 = arith.mulf %106, %112 : vector<16x16xf32>
    %114 = arith.truncf %113 : vector<16x16xf32> to vector<16x16xbf16>
    %115 = vector.extract_strided_slice %3 {offsets = [0, 48], sizes = [16, 16], strides = [1, 1]} : vector<16x64xbf16> to vector<16x16xbf16>
    %cst_40 = arith.constant dense<0.000000e+00> : vector<16x16xf32>
    %116 = tpu.matmul %114, %115, %cst_40 {dimension_numbers = #tpu.dot_dimension_numbers<[1], [0], [0], [1], [0, 0, 1, 1], [], []>} : vector<16x16xbf16>, vector<16x16xbf16>, vector<16x16xf32> -> vector<16x16xf32>
    %117 = tpu.concatenate %38, %64, %90, %116 in 1 : vector<16x16xf32>, vector<16x16xf32>, vector<16x16xf32>, vector<16x16xf32> -> vector<16x64xf32>
    %118 = vector.broadcast %12 : vector<1x64xf32> to vector<16x64xf32>
    %119 = arith.addf %117, %118 : vector<16x64xf32>
    %cst_41 = arith.constant 0.000000e+00 : f32
    %120 = vector.broadcast %cst_41 : f32 to vector<16x64xf32>
    %121 = arith.cmpf ogt, %119, %120 : vector<16x64xf32>
    %cst_42 = arith.constant 0.000000e+00 : f32
    %122 = vector.broadcast %cst_42 : f32 to vector<16x64xf32>
    %123 = arith.minimumf %119, %122 : vector<16x64xf32>
    %124 = math.exp %123 : vector<16x64xf32>
    %cst_43 = arith.constant 1.000000e+00 : f32
    %125 = vector.broadcast %cst_43 : f32 to vector<16x64xf32>
    %126 = arith.subf %124, %125 : vector<16x64xf32>
    %127 = arith.select %121, %119, %126 : vector<16x64xi1>, vector<16x64xf32>
    %c0_44 = arith.constant 0 : index
    %c0_45 = arith.constant 0 : index
    %128 = vector.load %arg9[%c0_44, %c0_45] : memref<16x64xf32, #tpu.memory_space<vmem>>, vector<16x64xf32>
    tpu.vector_store %arg9[%c0_44, %c0_45], %127 {strides = array<i32>} : memref<16x64xf32, #tpu.memory_space<vmem>>, vector<16x64xf32>,
    return
  }
  func.func @transform_0(%arg0: i32) -> (i32, i32) {
    %c0_i32 = arith.constant 0 : i32
    %c0_i32_0 = arith.constant 0 : i32
    %c0_i32_1 = arith.constant 0 : i32
    return %c0_i32, %c0_i32_0 : i32, i32
  }
  func.func @transform_1(%arg0: i32) -> (i32, i32) {
    %c0_i32 = arith.constant 0 : i32
    %c0_i32_0 = arith.constant 0 : i32
    %c0_i32_1 = arith.constant 0 : i32
    return %c0_i32, %c0_i32_0 : i32, i32
  }
  func.func @transform_2(%arg0: i32) -> (i32, i32) {
    %c0_i32 = arith.constant 0 : i32
    %c0_i32_0 = arith.constant 0 : i32
    return %arg0, %c0_i32 : i32, i32
  }
  func.func @transform_3(%arg0: i32) -> (i32, i32) {
    %c0_i32 = arith.constant 0 : i32
    %c0_i32_0 = arith.constant 0 : i32
    return %arg0, %c0_i32 : i32, i32
  }
  func.func @transform_4(%arg0: i32) -> (i32, i32) {
    %c0_i32 = arith.constant 0 : i32
    %c0_i32_0 = arith.constant 0 : i32
    %c0_i32_1 = arith.constant 0 : i32
    return %c0_i32, %c0_i32_0 : i32, i32
  }
  func.func @transform_5(%arg0: i32) -> (i32, i32) {
    %c0_i32 = arith.constant 0 : i32
    %c0_i32_0 = arith.constant 0 : i32
    %c0_i32_1 = arith.constant 0 : i32
    return %c0_i32, %c0_i32_0 : i32, i32
  }
  func.func @transform_6(%arg0: i32) -> (i32, i32) {
    %c0_i32 = arith.constant 0 : i32
    %c0_i32_0 = arith.constant 0 : i32
    %c0_i32_1 = arith.constant 0 : i32
    return %c0_i32, %c0_i32_0 : i32, i32
  }
  func.func @transform_7(%arg0: i32) -> (i32, i32) {
    %c0_i32 = arith.constant 0 : i32
    %c0_i32_0 = arith.constant 0 : i32
    %c0_i32_1 = arith.constant 0 : i32
    return %c0_i32, %c0_i32_0 : i32, i32
  }
  func.func @transform_8(%arg0: i32) -> (i32, i32) {
    %c0_i32 = arith.constant 0 : i32
    %c0_i32_0 = arith.constant 0 : i32
    return %arg0, %c0_i32 : i32, i32
  }
}

module attributes {stable_mosaic.version = 11 : i64} {
  func.func @gat_conv_kernel(%arg0: i32, %arg1: memref<16x64xbf16, #tpu.memory_space<vmem>>, %arg2: memref<64x16xbf16, #tpu.memory_space<vmem>>, %arg3: memref<16x64xbf16, #tpu.memory_space<vmem>>, %arg4: memref<16x16xbf16, #tpu.memory_space<vmem>>, %arg5: memref<64x64xbf16, #tpu.memory_space<vmem>>, %arg6: memref<4x64xbf16, #tpu.memory_space<vmem>>, %arg7: memref<64x4xbf16, #tpu.memory_space<vmem>>, %arg8: memref<1x64xf32, #tpu.memory_space<vmem>>, %arg9: memref<16x64xf32, #tpu.memory_space<vmem>>) attributes {dimension_semantics = [#tpu.dimension_semantics<parallel>], iteration_bounds = array<i64: 1>, scalar_prefetch = 0 : i64, scratch_operands = 0 : i64, tpu.core_type = #tpu.core_type<tc>, window_params = [{pipeline_mode = #tpu.pipeline_mode<synchronous>, transform_indices = @transform_0, window_bounds = array<i64: 16, 64>}, {pipeline_mode = #tpu.pipeline_mode<synchronous>, transform_indices = @transform_1, window_bounds = array<i64: 64, 16>}, {transform_indices = @transform_2, window_bounds = array<i64: 16, 64>}, {transform_indices = @transform_3, window_bounds = array<i64: 16, 16>}, {pipeline_mode = #tpu.pipeline_mode<synchronous>, transform_indices = @transform_4, window_bounds = array<i64: 64, 64>}, {pipeline_mode = #tpu.pipeline_mode<synchronous>, transform_indices = @transform_5, window_bounds = array<i64: 4, 64>}, {pipeline_mode = #tpu.pipeline_mode<synchronous>, transform_indices = @transform_6, window_bounds = array<i64: 64, 4>}, {pipeline_mode = #tpu.pipeline_mode<synchronous>, transform_indices = @transform_7, window_bounds = array<i64: 1, 64>}, {transform_indices = @transform_8, window_bounds = array<i64: 16, 64>}]} {
    %c0 = arith.constant 0 : index
    %c0_0 = arith.constant 0 : index
    %0 = vector.load %arg1[%c0, %c0_0] : memref<16x64xbf16, #tpu.memory_space<vmem>>, vector<16x64xbf16>
    %c0_1 = arith.constant 0 : index
    %c0_2 = arith.constant 0 : index
    %1 = vector.load %arg5[%c0_1, %c0_2] : memref<64x64xbf16, #tpu.memory_space<vmem>>, vector<64x64xbf16>
    %cst = arith.constant dense<0.000000e+00> : vector<16x64xf32>
    %2 = tpu.matmul %0, %1, %cst {dimension_numbers = #tpu.dot_dimension_numbers<[1], [0], [0], [1], [0, 0, 1, 1], [], []>} : vector<16x64xbf16>, vector<64x64xbf16>, vector<16x64xf32> -> vector<16x64xf32>
    %3 = arith.truncf %2 : vector<16x64xf32> to vector<16x64xbf16>
    %c0_3 = arith.constant 0 : index
    %c0_4 = arith.constant 0 : index
    %4 = vector.load %arg6[%c0_3, %c0_4] : memref<4x64xbf16, #tpu.memory_space<vmem>>, vector<4x64xbf16>
    %c0_5 = arith.constant 0 : index
    %c0_6 = arith.constant 0 : index
    %5 = vector.load %arg2[%c0_5, %c0_6] : memref<64x16xbf16, #tpu.memory_space<vmem>>, vector<64x16xbf16>
    %cst_7 = arith.constant dense<0.000000e+00> : vector<4x16xf32>
    %6 = tpu.matmul %4, %5, %cst_7 {dimension_numbers = #tpu.dot_dimension_numbers<[1], [0], [0], [1], [0, 0, 1, 1], [], []>} : vector<4x64xbf16>, vector<64x16xbf16>, vector<4x16xf32> -> vector<4x16xf32>
    %c0_8 = arith.constant 0 : index
    %c0_9 = arith.constant 0 : index
    %7 = vector.load %arg3[%c0_8, %c0_9] : memref<16x64xbf16, #tpu.memory_space<vmem>>, vector<16x64xbf16>
    %c0_10 = arith.constant 0 : index
    %c0_11 = arith.constant 0 : index
    %8 = vector.load %arg7[%c0_10, %c0_11] : memref<64x4xbf16, #tpu.memory_space<vmem>>, vector<64x4xbf16>
    %cst_12 = arith.constant dense<0.000000e+00> : vector<16x4xf32>
    %9 = tpu.matmul %7, %8, %cst_12 {dimension_numbers = #tpu.dot_dimension_numbers<[1], [0], [0], [1], [0, 0, 1, 1], [], []>} : vector<16x64xbf16>, vector<64x4xbf16>, vector<16x4xf32> -> vector<16x4xf32>
    %c0_13 = arith.constant 0 : index
    %c0_14 = arith.constant 0 : index
    %10 = vector.load %arg4[%c0_13, %c0_14] : memref<16x16xbf16, #tpu.memory_space<vmem>>, vector<16x16xbf16>
    %11 = arith.extf %10 : vector<16x16xbf16> to vector<16x16xf32>
    %c0_15 = arith.constant 0 : index
    %c0_16 = arith.constant 0 : index
    %12 = vector.load %arg8[%c0_15, %c0_16] : memref<1x64xf32, #tpu.memory_space<vmem>>, vector<1x64xf32>
    %13 = vector.extract_strided_slice %9 {offsets = [0, 0], sizes = [16, 1], strides = [1, 1]} : vector<16x4xf32> to vector<16x1xf32>
    %14 = vector.extract_strided_slice %6 {offsets = [0, 0], sizes = [1, 16], strides = [1, 1]} : vector<4x16xf32> to vector<1x16xf32>
    %15 = vector.broadcast %13 : vector<16x1xf32> to vector<16x16xf32>
    %16 = vector.broadcast %14 : vector<1x16xf32> to vector<16x16xf32>
    %17 = arith.addf %15, %16 : vector<16x16xf32>
    %cst_17 = arith.constant 0.000000e+00 : f32
    %18 = vector.broadcast %cst_17 : f32 to vector<16x16xf32>
    %19 = arith.cmpf ogt, %17, %18 : vector<16x16xf32>
    %cst_18 = arith.constant 2.000000e-01 : f32
    %20 = vector.broadcast %cst_18 : f32 to vector<16x16xf32>
    %21 = arith.mulf %20, %17 : vector<16x16xf32>
    %22 = arith.select %19, %17, %21 : vector<16x16xi1>, vector<16x16xf32>
    %cst_19 = arith.constant dense<0xFF800000> : vector<16xf32>
    %23 = vector.multi_reduction <maximumf>, %22, %cst_19 [1] : vector<16x16xf32> to vector<16xf32>
    %24 = vector.shape_cast %23 : vector<16xf32> to vector<16x1xf32>
    %25 = vector.broadcast %24 : vector<16x1xf32> to vector<16x16xf32>
    %26 = arith.subf %22, %25 : vector<16x16xf32>
    %27 = math.exp %26 : vector<16x16xf32>
    %28 = arith.mulf %27, %11 : vector<16x16xf32>
    %cst_20 = arith.constant dense<0.000000e+00> : vector<16xf32>
    %29 = vector.multi_reduction <add>, %28, %cst_20 [1] : vector<16x16xf32> to vector<16xf32>
    %30 = vector.shape_cast %29 : vector<16xf32> to vector<16x1xf32>
    %cst_21 = arith.constant 1.000000e-30 : f32
    %31 = vector.broadcast %cst_21 : f32 to vector<16x1xf32>
    %32 = arith.maximumf %30, %31 : vector<16x1xf32>
    %33 = tpu.reciprocal %32 {approx = true} : vector<16x1xf32> -> vector<16x1xf32>
    %34 = vector.broadcast %33 : vector<16x1xf32> to vector<16x16xf32>
    %35 = arith.mulf %28, %34 : vector<16x16xf32>
    %36 = arith.truncf %35 : vector<16x16xf32> to vector<16x16xbf16>
    %37 = vector.extract_strided_slice %3 {offsets = [0, 0], sizes = [16, 16], strides = [1, 1]} : vector<16x64xbf16> to vector<16x16xbf16>
    %cst_22 = arith.constant dense<0.000000e+00> : vector<16x16xf32>
    %38 = tpu.matmul %36, %37, %cst_22 {dimension_numbers = #tpu.dot_dimension_numbers<[1], [0], [0], [1], [0, 0, 1, 1], [], []>} : vector<16x16xbf16>, vector<16x16xbf16>, vector<16x16xf32> -> vector<16x16xf32>
    %39 = vector.extract_strided_slice %9 {offsets = [0, 1], sizes = [16, 1], strides = [1, 1]} : vector<16x4xf32> to vector<16x1xf32>
    %40 = vector.extract_strided_slice %6 {offsets = [1, 0], sizes = [1, 16], strides = [1, 1]} : vector<4x16xf32> to vector<1x16xf32>
    %41 = vector.broadcast %39 : vector<16x1xf32> to vector<16x16xf32>
    %42 = vector.broadcast %40 : vector<1x16xf32> to vector<16x16xf32>
    %43 = arith.addf %41, %42 : vector<16x16xf32>
    %cst_23 = arith.constant 0.000000e+00 : f32
    %44 = vector.broadcast %cst_23 : f32 to vector<16x16xf32>
    %45 = arith.cmpf ogt, %43, %44 : vector<16x16xf32>
    %cst_24 = arith.constant 2.000000e-01 : f32
    %46 = vector.broadcast %cst_24 : f32 to vector<16x16xf32>
    %47 = arith.mulf %46, %43 : vector<16x16xf32>
    %48 = arith.select %45, %43, %47 : vector<16x16xi1>, vector<16x16xf32>
    %cst_25 = arith.constant dense<0xFF800000> : vector<16xf32>
    %49 = vector.multi_reduction <maximumf>, %48, %cst_25 [1] : vector<16x16xf32> to vector<16xf32>
    %50 = vector.shape_cast %49 : vector<16xf32> to vector<16x1xf32>
    %51 = vector.broadcast %50 : vector<16x1xf32> to vector<16x16xf32>
    %52 = arith.subf %48, %51 : vector<16x16xf32>
    %53 = math.exp %52 : vector<16x16xf32>
    %54 = arith.mulf %53, %11 : vector<16x16xf32>
    %cst_26 = arith.constant dense<0.000000e+00> : vector<16xf32>
    %55 = vector.multi_reduction <add>, %54, %cst_26 [1] : vector<16x16xf32> to vector<16xf32>
    %56 = vector.shape_cast %55 : vector<16xf32> to vector<16x1xf32>
    %cst_27 = arith.constant 1.000000e-30 : f32
    %57 = vector.broadcast %cst_27 : f32 to vector<16x1xf32>
    %58 = arith.maximumf %56, %57 : vector<16x1xf32>
    %59 = tpu.reciprocal %58 {approx = true} : vector<16x1xf32> -> vector<16x1xf32>
    %60 = vector.broadcast %59 : vector<16x1xf32> to vector<16x16xf32>
    %61 = arith.mulf %54, %60 : vector<16x16xf32>
    %62 = arith.truncf %61 : vector<16x16xf32> to vector<16x16xbf16>
    %63 = vector.extract_strided_slice %3 {offsets = [0, 16], sizes = [16, 16], strides = [1, 1]} : vector<16x64xbf16> to vector<16x16xbf16>
    %cst_28 = arith.constant dense<0.000000e+00> : vector<16x16xf32>
    %64 = tpu.matmul %62, %63, %cst_28 {dimension_numbers = #tpu.dot_dimension_numbers<[1], [0], [0], [1], [0, 0, 1, 1], [], []>} : vector<16x16xbf16>, vector<16x16xbf16>, vector<16x16xf32> -> vector<16x16xf32>
    %65 = vector.extract_strided_slice %9 {offsets = [0, 2], sizes = [16, 1], strides = [1, 1]} : vector<16x4xf32> to vector<16x1xf32>
    %66 = vector.extract_strided_slice %6 {offsets = [2, 0], sizes = [1, 16], strides = [1, 1]} : vector<4x16xf32> to vector<1x16xf32>
    %67 = vector.broadcast %65 : vector<16x1xf32> to vector<16x16xf32>
    %68 = vector.broadcast %66 : vector<1x16xf32> to vector<16x16xf32>
    %69 = arith.addf %67, %68 : vector<16x16xf32>
    %cst_29 = arith.constant 0.000000e+00 : f32
    %70 = vector.broadcast %cst_29 : f32 to vector<16x16xf32>
    %71 = arith.cmpf ogt, %69, %70 : vector<16x16xf32>
    %cst_30 = arith.constant 2.000000e-01 : f32
    %72 = vector.broadcast %cst_30 : f32 to vector<16x16xf32>
    %73 = arith.mulf %72, %69 : vector<16x16xf32>
    %74 = arith.select %71, %69, %73 : vector<16x16xi1>, vector<16x16xf32>
    %cst_31 = arith.constant dense<0xFF800000> : vector<16xf32>
    %75 = vector.multi_reduction <maximumf>, %74, %cst_31 [1] : vector<16x16xf32> to vector<16xf32>
    %76 = vector.shape_cast %75 : vector<16xf32> to vector<16x1xf32>
    %77 = vector.broadcast %76 : vector<16x1xf32> to vector<16x16xf32>
    %78 = arith.subf %74, %77 : vector<16x16xf32>
    %79 = math.exp %78 : vector<16x16xf32>
    %80 = arith.mulf %79, %11 : vector<16x16xf32>
    %cst_32 = arith.constant dense<0.000000e+00> : vector<16xf32>
    %81 = vector.multi_reduction <add>, %80, %cst_32 [1] : vector<16x16xf32> to vector<16xf32>
    %82 = vector.shape_cast %81 : vector<16xf32> to vector<16x1xf32>
    %cst_33 = arith.constant 1.000000e-30 : f32
    %83 = vector.broadcast %cst_33 : f32 to vector<16x1xf32>
    %84 = arith.maximumf %82, %83 : vector<16x1xf32>
    %85 = tpu.reciprocal %84 {approx = true} : vector<16x1xf32> -> vector<16x1xf32>
    %86 = vector.broadcast %85 : vector<16x1xf32> to vector<16x16xf32>
    %87 = arith.mulf %80, %86 : vector<16x16xf32>
    %88 = arith.truncf %87 : vector<16x16xf32> to vector<16x16xbf16>
    %89 = vector.extract_strided_slice %3 {offsets = [0, 32], sizes = [16, 16], strides = [1, 1]} : vector<16x64xbf16> to vector<16x16xbf16>
    %cst_34 = arith.constant dense<0.000000e+00> : vector<16x16xf32>
    %90 = tpu.matmul %88, %89, %cst_34 {dimension_numbers = #tpu.dot_dimension_numbers<[1], [0], [0], [1], [0, 0, 1, 1], [], []>} : vector<16x16xbf16>, vector<16x16xbf16>, vector<16x16xf32> -> vector<16x16xf32>
    %91 = vector.extract_strided_slice %9 {offsets = [0, 3], sizes = [16, 1], strides = [1, 1]} : vector<16x4xf32> to vector<16x1xf32>
    %92 = vector.extract_strided_slice %6 {offsets = [3, 0], sizes = [1, 16], strides = [1, 1]} : vector<4x16xf32> to vector<1x16xf32>
    %93 = vector.broadcast %91 : vector<16x1xf32> to vector<16x16xf32>
    %94 = vector.broadcast %92 : vector<1x16xf32> to vector<16x16xf32>
    %95 = arith.addf %93, %94 : vector<16x16xf32>
    %cst_35 = arith.constant 0.000000e+00 : f32
    %96 = vector.broadcast %cst_35 : f32 to vector<16x16xf32>
    %97 = arith.cmpf ogt, %95, %96 : vector<16x16xf32>
    %cst_36 = arith.constant 2.000000e-01 : f32
    %98 = vector.broadcast %cst_36 : f32 to vector<16x16xf32>
    %99 = arith.mulf %98, %95 : vector<16x16xf32>
    %100 = arith.select %97, %95, %99 : vector<16x16xi1>, vector<16x16xf32>
    %cst_37 = arith.constant dense<0xFF800000> : vector<16xf32>
    %101 = vector.multi_reduction <maximumf>, %100, %cst_37 [1] : vector<16x16xf32> to vector<16xf32>
    %102 = vector.shape_cast %101 : vector<16xf32> to vector<16x1xf32>
    %103 = vector.broadcast %102 : vector<16x1xf32> to vector<16x16xf32>
    %104 = arith.subf %100, %103 : vector<16x16xf32>
    %105 = math.exp %104 : vector<16x16xf32>
    %106 = arith.mulf %105, %11 : vector<16x16xf32>
    %cst_38 = arith.constant dense<0.000000e+00> : vector<16xf32>
    %107 = vector.multi_reduction <add>, %106, %cst_38 [1] : vector<16x16xf32> to vector<16xf32>
    %108 = vector.shape_cast %107 : vector<16xf32> to vector<16x1xf32>
    %cst_39 = arith.constant 1.000000e-30 : f32
    %109 = vector.broadcast %cst_39 : f32 to vector<16x1xf32>
    %110 = arith.maximumf %108, %109 : vector<16x1xf32>
    %111 = tpu.reciprocal %110 {approx = true} : vector<16x1xf32> -> vector<16x1xf32>
    %112 = vector.broadcast %111 : vector<16x1xf32> to vector<16x16xf32>
    %113 = arith.mulf %106, %112 : vector<16x16xf32>
    %114 = arith.truncf %113 : vector<16x16xf32> to vector<16x16xbf16>
    %115 = vector.extract_strided_slice %3 {offsets = [0, 48], sizes = [16, 16], strides = [1, 1]} : vector<16x64xbf16> to vector<16x16xbf16>
    %cst_40 = arith.constant dense<0.000000e+00> : vector<16x16xf32>
    %116 = tpu.matmul %114, %115, %cst_40 {dimension_numbers = #tpu.dot_dimension_numbers<[1], [0], [0], [1], [0, 0, 1, 1], [], []>} : vector<16x16xbf16>, vector<16x16xbf16>, vector<16x16xf32> -> vector<16x16xf32>
    %117 = tpu.concatenate %38, %64, %90, %116 in 1 : vector<16x16xf32>, vector<16x16xf32>, vector<16x16xf32>, vector<16x16xf32> -> vector<16x64xf32>
    %118 = vector.broadcast %12 : vector<1x64xf32> to vector<16x64xf32>
    %119 = arith.addf %117, %118 : vector<16x64xf32>
    %cst_41 = arith.constant 0.000000e+00 : f32
    %120 = vector.broadcast %cst_41 : f32 to vector<16x64xf32>
    %121 = arith.cmpf ogt, %119, %120 : vector<16x64xf32>
    %cst_42 = arith.constant 0.000000e+00 : f32
    %122 = vector.broadcast %cst_42 : f32 to vector<16x64xf32>
    %123 = arith.minimumf %119, %122 : vector<16x64xf32>
    %124 = math.exp %123 : vector<16x64xf32>
    %cst_43 = arith.constant 1.000000e+00 : f32
    %125 = vector.broadcast %cst_43 : f32 to vector<16x64xf32>
    %126 = arith.subf %124, %125 : vector<16x64xf32>
    %127 = arith.select %121, %119, %126 : vector<16x64xi1>, vector<16x64xf32>
    %c0_44 = arith.constant 0 : index
    %c0_45 = arith.constant 0 : index
    %128 = vector.load %arg9[%c0_44, %c0_45] : memref<16x64xf32, #tpu.memory_space<vmem>>, vector<16x64xf32>
    tpu.vector_store %arg9[%c0_44, %c0_45], %127 {strides = array<i32>} : memref<16x64xf32, #tpu.memory_space<vmem>>, vector<16x64xf32>,
    return
  }
  func.func @transform_0(%arg0: i32) -> (i32, i32) {
    %c0_i32 = arith.constant 0 : i32
    %c0_i32_0 = arith.constant 0 : i32
    %c0_i32_1 = arith.constant 0 : i32
    return %c0_i32, %c0_i32_0 : i32, i32
  }
  func.func @transform_1(%arg0: i32) -> (i32, i32) {
    %c0_i32 = arith.constant 0 : i32
    %c0_i32_0 = arith.constant 0 : i32
    %c0_i32_1 = arith.constant 0 : i32
    return %c0_i32, %c0_i32_0 : i32, i32
  }
  func.func @transform_2(%arg0: i32) -> (i32, i32) {
    %c0_i32 = arith.constant 0 : i32
    %c0_i32_0 = arith.constant 0 : i32
    return %arg0, %c0_i32 : i32, i32
  }
  func.func @transform_3(%arg0: i32) -> (i32, i32) {
    %c0_i32 = arith.constant 0 : i32
    %c0_i32_0 = arith.constant 0 : i32
    return %arg0, %c0_i32 : i32, i32
  }
  func.func @transform_4(%arg0: i32) -> (i32, i32) {
    %c0_i32 = arith.constant 0 : i32
    %c0_i32_0 = arith.constant 0 : i32
    %c0_i32_1 = arith.constant 0 : i32
    return %c0_i32, %c0_i32_0 : i32, i32
  }
  func.func @transform_5(%arg0: i32) -> (i32, i32) {
    %c0_i32 = arith.constant 0 : i32
    %c0_i32_0 = arith.constant 0 : i32
    %c0_i32_1 = arith.constant 0 : i32
    return %c0_i32, %c0_i32_0 : i32, i32
  }
  func.func @transform_6(%arg0: i32) -> (i32, i32) {
    %c0_i32 = arith.constant 0 : i32
    %c0_i32_0 = arith.constant 0 : i32
    %c0_i32_1 = arith.constant 0 : i32
    return %c0_i32, %c0_i32_0 : i32, i32
  }
  func.func @transform_7(%arg0: i32) -> (i32, i32) {
    %c0_i32 = arith.constant 0 : i32
    %c0_i32_0 = arith.constant 0 : i32
    %c0_i32_1 = arith.constant 0 : i32
    return %c0_i32, %c0_i32_0 : i32, i32
  }
  func.func @transform_8(%arg0: i32) -> (i32, i32) {
    %c0_i32 = arith.constant 0 : i32
    %c0_i32_0 = arith.constant 0 : i32
    return %arg0, %c0_i32 : i32, i32
  }
}

module attributes {stable_mosaic.version = 11 : i64} {
  func.func @gat_conv_kernel(%arg0: i32, %arg1: memref<16x64xbf16, #tpu.memory_space<vmem>>, %arg2: memref<64x16xbf16, #tpu.memory_space<vmem>>, %arg3: memref<16x64xbf16, #tpu.memory_space<vmem>>, %arg4: memref<16x16xbf16, #tpu.memory_space<vmem>>, %arg5: memref<64x8xbf16, #tpu.memory_space<vmem>>, %arg6: memref<1x64xbf16, #tpu.memory_space<vmem>>, %arg7: memref<64x1xbf16, #tpu.memory_space<vmem>>, %arg8: memref<1x8xf32, #tpu.memory_space<vmem>>, %arg9: memref<16x8xf32, #tpu.memory_space<vmem>>) attributes {dimension_semantics = [#tpu.dimension_semantics<parallel>], iteration_bounds = array<i64: 1>, scalar_prefetch = 0 : i64, scratch_operands = 0 : i64, tpu.core_type = #tpu.core_type<tc>, window_params = [{pipeline_mode = #tpu.pipeline_mode<synchronous>, transform_indices = @transform_0, window_bounds = array<i64: 16, 64>}, {pipeline_mode = #tpu.pipeline_mode<synchronous>, transform_indices = @transform_1, window_bounds = array<i64: 64, 16>}, {transform_indices = @transform_2, window_bounds = array<i64: 16, 64>}, {transform_indices = @transform_3, window_bounds = array<i64: 16, 16>}, {pipeline_mode = #tpu.pipeline_mode<synchronous>, transform_indices = @transform_4, window_bounds = array<i64: 64, 8>}, {pipeline_mode = #tpu.pipeline_mode<synchronous>, transform_indices = @transform_5, window_bounds = array<i64: 1, 64>}, {pipeline_mode = #tpu.pipeline_mode<synchronous>, transform_indices = @transform_6, window_bounds = array<i64: 64, 1>}, {pipeline_mode = #tpu.pipeline_mode<synchronous>, transform_indices = @transform_7, window_bounds = array<i64: 1, 8>}, {transform_indices = @transform_8, window_bounds = array<i64: 16, 8>}]} {
    %c0 = arith.constant 0 : index
    %c0_0 = arith.constant 0 : index
    %0 = vector.load %arg1[%c0, %c0_0] : memref<16x64xbf16, #tpu.memory_space<vmem>>, vector<16x64xbf16>
    %c0_1 = arith.constant 0 : index
    %c0_2 = arith.constant 0 : index
    %1 = vector.load %arg5[%c0_1, %c0_2] : memref<64x8xbf16, #tpu.memory_space<vmem>>, vector<64x8xbf16>
    %cst = arith.constant dense<0.000000e+00> : vector<16x8xf32>
    %2 = tpu.matmul %0, %1, %cst {dimension_numbers = #tpu.dot_dimension_numbers<[1], [0], [0], [1], [0, 0, 1, 1], [], []>} : vector<16x64xbf16>, vector<64x8xbf16>, vector<16x8xf32> -> vector<16x8xf32>
    %3 = arith.truncf %2 : vector<16x8xf32> to vector<16x8xbf16>
    %c0_3 = arith.constant 0 : index
    %c0_4 = arith.constant 0 : index
    %4 = vector.load %arg6[%c0_3, %c0_4] : memref<1x64xbf16, #tpu.memory_space<vmem>>, vector<1x64xbf16>
    %c0_5 = arith.constant 0 : index
    %c0_6 = arith.constant 0 : index
    %5 = vector.load %arg2[%c0_5, %c0_6] : memref<64x16xbf16, #tpu.memory_space<vmem>>, vector<64x16xbf16>
    %cst_7 = arith.constant dense<0.000000e+00> : vector<1x16xf32>
    %6 = tpu.matmul %4, %5, %cst_7 {dimension_numbers = #tpu.dot_dimension_numbers<[1], [0], [0], [1], [0, 0, 1, 1], [], []>} : vector<1x64xbf16>, vector<64x16xbf16>, vector<1x16xf32> -> vector<1x16xf32>
    %c0_8 = arith.constant 0 : index
    %c0_9 = arith.constant 0 : index
    %7 = vector.load %arg3[%c0_8, %c0_9] : memref<16x64xbf16, #tpu.memory_space<vmem>>, vector<16x64xbf16>
    %c0_10 = arith.constant 0 : index
    %c0_11 = arith.constant 0 : index
    %8 = vector.load %arg7[%c0_10, %c0_11] : memref<64x1xbf16, #tpu.memory_space<vmem>>, vector<64x1xbf16>
    %cst_12 = arith.constant dense<0.000000e+00> : vector<16x1xf32>
    %9 = tpu.matmul %7, %8, %cst_12 {dimension_numbers = #tpu.dot_dimension_numbers<[1], [0], [0], [1], [0, 0, 1, 1], [], []>} : vector<16x64xbf16>, vector<64x1xbf16>, vector<16x1xf32> -> vector<16x1xf32>
    %c0_13 = arith.constant 0 : index
    %c0_14 = arith.constant 0 : index
    %10 = vector.load %arg4[%c0_13, %c0_14] : memref<16x16xbf16, #tpu.memory_space<vmem>>, vector<16x16xbf16>
    %11 = arith.extf %10 : vector<16x16xbf16> to vector<16x16xf32>
    %c0_15 = arith.constant 0 : index
    %c0_16 = arith.constant 0 : index
    %12 = vector.load %arg8[%c0_15, %c0_16] : memref<1x8xf32, #tpu.memory_space<vmem>>, vector<1x8xf32>
    %13 = vector.broadcast %9 : vector<16x1xf32> to vector<16x16xf32>
    %14 = vector.broadcast %6 : vector<1x16xf32> to vector<16x16xf32>
    %15 = arith.addf %13, %14 : vector<16x16xf32>
    %cst_17 = arith.constant 0.000000e+00 : f32
    %16 = vector.broadcast %cst_17 : f32 to vector<16x16xf32>
    %17 = arith.cmpf ogt, %15, %16 : vector<16x16xf32>
    %cst_18 = arith.constant 2.000000e-01 : f32
    %18 = vector.broadcast %cst_18 : f32 to vector<16x16xf32>
    %19 = arith.mulf %18, %15 : vector<16x16xf32>
    %20 = arith.select %17, %15, %19 : vector<16x16xi1>, vector<16x16xf32>
    %cst_19 = arith.constant dense<0xFF800000> : vector<16xf32>
    %21 = vector.multi_reduction <maximumf>, %20, %cst_19 [1] : vector<16x16xf32> to vector<16xf32>
    %22 = vector.shape_cast %21 : vector<16xf32> to vector<16x1xf32>
    %23 = vector.broadcast %22 : vector<16x1xf32> to vector<16x16xf32>
    %24 = arith.subf %20, %23 : vector<16x16xf32>
    %25 = math.exp %24 : vector<16x16xf32>
    %26 = arith.mulf %25, %11 : vector<16x16xf32>
    %cst_20 = arith.constant dense<0.000000e+00> : vector<16xf32>
    %27 = vector.multi_reduction <add>, %26, %cst_20 [1] : vector<16x16xf32> to vector<16xf32>
    %28 = vector.shape_cast %27 : vector<16xf32> to vector<16x1xf32>
    %cst_21 = arith.constant 1.000000e-30 : f32
    %29 = vector.broadcast %cst_21 : f32 to vector<16x1xf32>
    %30 = arith.maximumf %28, %29 : vector<16x1xf32>
    %31 = tpu.reciprocal %30 {approx = true} : vector<16x1xf32> -> vector<16x1xf32>
    %32 = vector.broadcast %31 : vector<16x1xf32> to vector<16x16xf32>
    %33 = arith.mulf %26, %32 : vector<16x16xf32>
    %34 = arith.truncf %33 : vector<16x16xf32> to vector<16x16xbf16>
    %cst_22 = arith.constant dense<0.000000e+00> : vector<16x8xf32>
    %35 = tpu.matmul %34, %3, %cst_22 {dimension_numbers = #tpu.dot_dimension_numbers<[1], [0], [0], [1], [0, 0, 1, 1], [], []>} : vector<16x16xbf16>, vector<16x8xbf16>, vector<16x8xf32> -> vector<16x8xf32>
    %36 = vector.broadcast %12 : vector<1x8xf32> to vector<16x8xf32>
    %37 = arith.addf %35, %36 : vector<16x8xf32>
    %c0_23 = arith.constant 0 : index
    %c0_24 = arith.constant 0 : index
    %38 = vector.load %arg9[%c0_23, %c0_24] : memref<16x8xf32, #tpu.memory_space<vmem>>, vector<16x8xf32>
    tpu.vector_store %arg9[%c0_23, %c0_24], %37 {strides = array<i32>} : memref<16x8xf32, #tpu.memory_space<vmem>>, vector<16x8xf32>,
    return
  }
  func.func @transform_0(%arg0: i32) -> (i32, i32) {
    %c0_i32 = arith.constant 0 : i32
    %c0_i32_0 = arith.constant 0 : i32
    %c0_i32_1 = arith.constant 0 : i32
    return %c0_i32, %c0_i32_0 : i32, i32
  }
  func.func @transform_1(%arg0: i32) -> (i32, i32) {
    %c0_i32 = arith.constant 0 : i32
    %c0_i32_0 = arith.constant 0 : i32
    %c0_i32_1 = arith.constant 0 : i32
    return %c0_i32, %c0_i32_0 : i32, i32
  }
  func.func @transform_2(%arg0: i32) -> (i32, i32) {
    %c0_i32 = arith.constant 0 : i32
    %c0_i32_0 = arith.constant 0 : i32
    return %arg0, %c0_i32 : i32, i32
  }
  func.func @transform_3(%arg0: i32) -> (i32, i32) {
    %c0_i32 = arith.constant 0 : i32
    %c0_i32_0 = arith.constant 0 : i32
    return %arg0, %c0_i32 : i32, i32
  }
  func.func @transform_4(%arg0: i32) -> (i32, i32) {
    %c0_i32 = arith.constant 0 : i32
    %c0_i32_0 = arith.constant 0 : i32
    %c0_i32_1 = arith.constant 0 : i32
    return %c0_i32, %c0_i32_0 : i32, i32
  }
  func.func @transform_5(%arg0: i32) -> (i32, i32) {
    %c0_i32 = arith.constant 0 : i32
    %c0_i32_0 = arith.constant 0 : i32
    %c0_i32_1 = arith.constant 0 : i32
    return %c0_i32, %c0_i32_0 : i32, i32
  }
  func.func @transform_6(%arg0: i32) -> (i32, i32) {
    %c0_i32 = arith.constant 0 : i32
    %c0_i32_0 = arith.constant 0 : i32
    %c0_i32_1 = arith.constant 0 : i32
    return %c0_i32, %c0_i32_0 : i32, i32
  }
  func.func @transform_7(%arg0: i32) -> (i32, i32) {
    %c0_i32 = arith.constant 0 : i32
    %c0_i32_0 = arith.constant 0 : i32
    %c0_i32_1 = arith.constant 0 : i32
    return %c0_i32, %c0_i32_0 : i32, i32
  }
  func.func @transform_8(%arg0: i32) -> (i32, i32) {
    %c0_i32 = arith.constant 0 : i32
    %c0_i32_0 = arith.constant 0 : i32
    return %arg0, %c0_i32 : i32, i32
  }
}

</mosaic_0001>

<llo_original>
// kernel: gat_forward.5
$region0: #{gat_forward.5}
  #allocation0 [shape = 'u32[]', space=smem, size = 0x4, offset = 0x4, fixed_abs, tag = 'smem constant byte address 0x4 - core index']
  #allocation1 [shape = 'u32[144,128]{1,0:T(1,128)}', space=vmem, size = 0x12000, scoped, tag = 'internal scratch']
  %s0 = inlined_call_operand.vmem [shape: bf16[16,64], index: 0, kind: input, shape index: {}, may-alias: {0,2}]
  %s1 = inlined_call_operand.vmem [shape: bf16[64,16], index: 1, kind: input, shape index: {}]
  %s2 = inlined_call_operand.vmem [shape: bf16[16,64], index: 2, kind: input, shape index: {}, may-alias: {0,2}]
  %s3 = inlined_call_operand.vmem [shape: bf16[16,16], index: 3, kind: input, shape index: {}]
  %s4 = inlined_call_operand.vmem [shape: bf16[64,8], index: 4, kind: input, shape index: {}]
  %s5 = inlined_call_operand.vmem [shape: bf16[1,64], index: 5, kind: input, shape index: {}]
  %s6 = inlined_call_operand.vmem [shape: bf16[64,1], index: 6, kind: input, shape index: {}]
  %s7 = inlined_call_operand.vmem [shape: f32[1,8], index: 7, kind: input, shape index: {}]
  %s8 = inlined_call_operand.vmem [shape: f32[16,8], index: 8, kind: output, shape index: {}]
  %s9 = sld [smem:[#allocation0]]
  $region42: #{gat_forward.5} parent=0
    _
  %s11 = ssub.s32 1, %s9
  %s12 = scalar_select 0, %s11, %s9
  // Predicated region
  $region2: #{gat_forward.5} parent=0 // pred_check
    _
  $region3: #{gat_forward.5} parent=0 // pred_check_branch
    %14 = sbr.rel (0) target = $region5
  $region4: #{gat_forward.5} parent=0 // pred_region
    _
  $region5: #{gat_forward.5} parent=0 // pred_fallthru
    _
  // Predicated region
  $region6: #{gat_forward.5} parent=0 // pred_check
    _
  $region7: #{gat_forward.5} parent=0 // pred_check_branch
    %16 = sbr.rel (0) target = $region9
  $region8: #{gat_forward.5} parent=0 // pred_region
    _
  $region9: #{gat_forward.5} parent=0 // pred_fallthru
    _
  // Predicated region
  $region10: #{gat_forward.5} parent=0 // pred_check
    _
  $region11: #{gat_forward.5} parent=0 // pred_check_branch
    %18 = sbr.rel (0) target = $region13
  $region12: #{gat_forward.5} parent=0 // pred_region
    _
  $region13: #{gat_forward.5} parent=0 // pred_fallthru
    _
  // Predicated region
  $region14: #{gat_forward.5} parent=0 // pred_check
    _
  $region15: #{gat_forward.5} parent=0 // pred_check_branch
    %20 = sbr.rel (0) target = $region17
  $region16: #{gat_forward.5} parent=0 // pred_region
    _
  $region17: #{gat_forward.5} parent=0 // pred_fallthru
    _
  // Predicated region
  $region18: #{gat_forward.5} parent=0 // pred_check
    _
  $region19: #{gat_forward.5} parent=0 // pred_check_branch
    %22 = sbr.rel (0) target = $region21
  $region20: #{gat_forward.5} parent=0 // pred_region
    _
  $region21: #{gat_forward.5} parent=0 // pred_fallthru
    _
  // Predicated region
  $region22: #{gat_forward.5} parent=0 // pred_check
    _
  $region23: #{gat_forward.5} parent=0 // pred_check_branch
    %24 = sbr.rel (0) target = $region25
  $region24: #{gat_forward.5} parent=0 // pred_region
    _
  $region25: #{gat_forward.5} parent=0 // pred_fallthru
    _
  // Predicated region
  $region26: #{gat_forward.5} parent=0 // pred_check
    _
  $region27: #{gat_forward.5} parent=0 // pred_check_branch
    %26 = sbr.rel (0) target = $region29
  $region28: #{gat_forward.5} parent=0 // pred_region
    _
  $region29: #{gat_forward.5} parent=0 // pred_fallthru
    _
  // Predicated region
  $region30: #{gat_forward.5} parent=0 // pred_check
    _
  $region31: #{gat_forward.5} parent=0 // pred_check_branch
    %28 = sbr.rel (0) target = $region33
  $region32: #{gat_forward.5} parent=0 // pred_region
    _
  $region33: #{gat_forward.5} parent=0 // pred_fallthru
    _
  %v30 = vld [vmem:[%s0] sm:$0xf]
  %v31 = vld [vmem:[%s0 + $0x4] sm:$0xf]
  %v32 = vld [vmem:[%s4] sm:$0xf]
  %v33 = vld [vmem:[%s4 + $0x4] sm:$0xf]
  %v34 = vld [vmem:[%s4 + $0x8] sm:$0xf]
  %v35 = vld [vmem:[%s4 + $0xc] sm:$0xf]
  %v36 = vld [vmem:[%s4 + $0x10] sm:$0xf]
  %v37 = vld [vmem:[%s4 + $0x14] sm:$0xf]
  %v38 = vld [vmem:[%s4 + $0x18] sm:$0xf]
  %v39 = vld [vmem:[%s4 + $0x1c] sm:$0xf]
  %v42 = vunpack.c.l.b16 %v30
  %v43 = vunpack.c.l.b16 %v31
  %v44 = vpack.c.b16 %v43, %v42
  %v53 = vunpack.c.l.b16 %v32
  %v54 = vunpack.c.l.b16 %v33
  %v55 = vunpack.c.l.b16 %v34
  %v56 = vunpack.c.l.b16 %v35
  %v57 = vunpack.c.l.b16 %v36
  %v58 = vunpack.c.l.b16 %v37
  %v59 = vunpack.c.l.b16 %v38
  %v60 = vunpack.c.l.b16 %v39
  %v61 = vpack.c.b16 %v54, %v53
  %v62 = vpack.c.b16 %v56, %v55
  %v63 = vpack.c.b16 %v58, %v57
  %v64 = vpack.c.b16 %v60, %v59
  %vm69 = vcmask 523264
  %v71 = vsel %vm69, %v44, 0
  %73 = vmatprep.subr.bf16.mxu0 0
  %74 = vmatpush1.bf16.msra.mxu0 %v61
  %75 = vmatprep.subr.bf16.mxu0 0
  %76 = vmatpush1.bf16.msra.mxu0 %v62
  %77 = vmatprep.subr.bf16.mxu0 0
  %78 = vmatpush1.bf16.msra.mxu0 %v63
  %79 = vmatprep.subr.bf16.mxu0 0
  %80 = vmatpush1.bf16.msra.mxu0 %v64
  %81 = vmatprep.subr.bf16.mxu0 0
  %82 = vmatpush1.bf16.msra.mxu0 0
  %83 = vmatprep.subr.bf16.mxu0 0
  %84 = vmatpush1.bf16.msra.mxu0 0
  %85 = vmatprep.subr.bf16.mxu0 0
  %86 = vmatpush1.bf16.msra.mxu0 0
  %87 = vmatprep.subr.bf16.mxu0 0
  %88 = vmatpush1.bf16.msra.mxu0 0
  %89 = vmatprep.subr.bf16.mxu0 0
  %90 = vmatpush1.bf16.msra.mxu0 0
  %91 = vmatprep.subr.bf16.mxu0 0
  %92 = vmatpush1.bf16.msra.mxu0 0
  %93 = vmatprep.subr.bf16.mxu0 0
  %94 = vmatpush1.bf16.msra.mxu0 0
  %95 = vmatprep.subr.bf16.mxu0 0
  %96 = vmatpush1.bf16.msra.mxu0 0
  %97 = vmatprep.subr.bf16.mxu0 0
  %98 = vmatpush1.bf16.msra.mxu0 0
  %99 = vmatprep.subr.bf16.mxu0 0
  %100 = vmatpush1.bf16.msra.mxu0 0
  %101 = vmatprep.subr.bf16.mxu0 0
  %102 = vmatpush1.bf16.msra.mxu0 0
  %103 = vmatprep.subr.bf16.mxu0 0
  %104 = vmatpush1.bf16.msra.mxu0 0
  %105 = vmatprep.mubr.bf16.mxu0 0
  %106 = vmatmul.mubr.bf16.gmra.mrb[0].mxu0 %v71
  %v107 = vpop.f32.mrb[0].mxu0
  %v108 = vadd.f32 0.0, %v107
  %v109 = vpop.f32.mrb[0].mxu0
  %v110 = vpop.f32.mrb[0].mxu0
  %v111 = vadd.f32 0.0, %v110
  %v112 = vpop.f32.mrb[0].mxu0
  %113 = vdwg.mxu0
  %v114 = vpack.c.bf16 %v111, %v108
  %v115 = vld [vmem:[%s5] sm:$0x1]
  %v116 = vld [vmem:[%s1] sm:$0xf]
  %v117 = vld [vmem:[%s1 + $0x4] sm:$0xf]
  %v118 = vld [vmem:[%s1 + $0x8] sm:$0xf]
  %v119 = vld [vmem:[%s1 + $0xc] sm:$0xf]
  %v120 = vld [vmem:[%s1 + $0x10] sm:$0xf]
  %v121 = vld [vmem:[%s1 + $0x14] sm:$0xf]
  %v122 = vld [vmem:[%s1 + $0x18] sm:$0xf]
  %v123 = vld [vmem:[%s1 + $0x1c] sm:$0xf]
  %v132 = vunpack.c.l.b16 %v116
  %v133 = vunpack.c.l.b16 %v117
  %v134 = vunpack.c.l.b16 %v118
  %v135 = vunpack.c.l.b16 %v119
  %v136 = vunpack.c.l.b16 %v120
  %v137 = vunpack.c.l.b16 %v121
  %v138 = vunpack.c.l.b16 %v122
  %v139 = vunpack.c.l.b16 %v123
  %v140 = vpack.c.b16 %v133, %v132
  %v141 = vpack.c.b16 %v135, %v134
  %v142 = vpack.c.b16 %v137, %v136
  %v143 = vpack.c.b16 %v139, %v138
  %v149 = vsel %vm69, %v115, 0
  %151 = vmatprep.subr.bf16.mxu0 0
  %152 = vmatpush1.bf16.msra.mxu0 %v140
  %153 = vmatprep.subr.bf16.mxu0 0
  %154 = vmatpush1.bf16.msra.mxu0 %v141
  %155 = vmatprep.subr.bf16.mxu0 0
  %156 = vmatpush1.bf16.msra.mxu0 %v142
  %157 = vmatprep.subr.bf16.mxu0 0
  %158 = vmatpush1.bf16.msra.mxu0 %v143
  %159 = vmatprep.subr.bf16.mxu0 0
  %160 = vmatpush1.bf16.msra.mxu0 0
  %161 = vmatprep.subr.bf16.mxu0 0
  %162 = vmatpush1.bf16.msra.mxu0 0
  %163 = vmatprep.subr.bf16.mxu0 0
  %164 = vmatpush1.bf16.msra.mxu0 0
  %165 = vmatprep.subr.bf16.mxu0 0
  %166 = vmatpush1.bf16.msra.mxu0 0
  %167 = vmatprep.subr.bf16.mxu0 0
  %168 = vmatpush1.bf16.msra.mxu0 0
  %169 = vmatprep.subr.bf16.mxu0 0
  %170 = vmatpush1.bf16.msra.mxu0 0
  %171 = vmatprep.subr.bf16.mxu0 0
  %172 = vmatpush1.bf16.msra.mxu0 0
  %173 = vmatprep.subr.bf16.mxu0 0
  %174 = vmatpush1.bf16.msra.mxu0 0
  %175 = vmatprep.subr.bf16.mxu0 0
  %176 = vmatpush1.bf16.msra.mxu0 0
  %177 = vmatprep.subr.bf16.mxu0 0
  %178 = vmatpush1.bf16.msra.mxu0 0
  %179 = vmatprep.subr.bf16.mxu0 0
  %180 = vmatpush1.bf16.msra.mxu0 0
  %181 = vmatprep.subr.bf16.mxu0 0
  %182 = vmatpush1.bf16.msra.mxu0 0
  %183 = vmatprep.mubr.bf16.mxu0 0
  %184 = vmatmul.mubr.bf16.gmra.mrb[0].mxu0 %v149
  %v185 = vpop.f32.mrb[0].mxu0
  %v186 = vadd.f32 0.0, %v185
  %v187 = vpop.f32.mrb[0].mxu0
  %v188 = vpop.f32.mrb[0].mxu0
  %v189 = vpop.f32.mrb[0].mxu0
  %190 = vdwg.mxu0
  %v191 = vld [vmem:[%s2] sm:$0xf]
  %v192 = vld [vmem:[%s2 + $0x4] sm:$0xf]
  %v193 = vld [vmem:[%s6] sm:$0xf]
  %v194 = vld [vmem:[%s6 + $0x4] sm:$0xf]
  %v195 = vld [vmem:[%s6 + $0x8] sm:$0xf]
  %v196 = vld [vmem:[%s6 + $0xc] sm:$0xf]
  %v197 = vld [vmem:[%s6 + $0x10] sm:$0xf]
  %v198 = vld [vmem:[%s6 + $0x14] sm:$0xf]
  %v199 = vld [vmem:[%s6 + $0x18] sm:$0xf]
  %v200 = vld [vmem:[%s6 + $0x1c] sm:$0xf]
  %v203 = vunpack.c.l.b16 %v191
  %v204 = vunpack.c.l.b16 %v192
  %v205 = vpack.c.b16 %v204, %v203
  %v214 = vunpack.c.l.b16 %v193
  %v215 = vunpack.c.l.b16 %v194
  %v216 = vunpack.c.l.b16 %v195
  %v217 = vunpack.c.l.b16 %v196
  %v218 = vunpack.c.l.b16 %v197
  %v219 = vunpack.c.l.b16 %v198
  %v220 = vunpack.c.l.b16 %v199
  %v221 = vunpack.c.l.b16 %v200
  %v222 = vpack.c.b16 %v215, %v214
  %v223 = vpack.c.b16 %v217, %v216
  %v224 = vpack.c.b16 %v219, %v218
  %v225 = vpack.c.b16 %v221, %v220
  %v231 = vsel %vm69, %v205, 0
  %233 = vmatprep.subr.bf16.mxu0 0
  %234 = vmatpush1.bf16.msra.mxu0 %v222
  %235 = vmatprep.subr.bf16.mxu0 0
  %236 = vmatpush1.bf16.msra.mxu0 %v223
  %237 = vmatprep.subr.bf16.mxu0 0
  %238 = vmatpush1.bf16.msra.mxu0 %v224
  %239 = vmatprep.subr.bf16.mxu0 0
  %240 = vmatpush1.bf16.msra.mxu0 %v225
  %241 = vmatprep.subr.bf16.mxu0 0
  %242 = vmatpush1.bf16.msra.mxu0 0
  %243 = vmatprep.subr.bf16.mxu0 0
  %244 = vmatpush1.bf16.msra.mxu0 0
  %245 = vmatprep.subr.bf16.mxu0 0
  %246 = vmatpush1.bf16.msra.mxu0 0
  %247 = vmatprep.subr.bf16.mxu0 0
  %248 = vmatpush1.bf16.msra.mxu0 0
  %249 = vmatprep.subr.bf16.mxu0 0
  %250 = vmatpush1.bf16.msra.mxu0 0
  %251 = vmatprep.subr.bf16.mxu0 0
  %252 = vmatpush1.bf16.msra.mxu0 0
  %253 = vmatprep.subr.bf16.mxu0 0
  %254 = vmatpush1.bf16.msra.mxu0 0
  %255 = vmatprep.subr.bf16.mxu0 0
  %256 = vmatpush1.bf16.msra.mxu0 0
  %257 = vmatprep.subr.bf16.mxu0 0
  %258 = vmatpush1.bf16.msra.mxu0 0
  %259 = vmatprep.subr.bf16.mxu0 0
  %260 = vmatpush1.bf16.msra.mxu0 0
  %261 = vmatprep.subr.bf16.mxu0 0
  %262 = vmatpush1.bf16.msra.mxu0 0
  %263 = vmatprep.subr.bf16.mxu0 0
  %264 = vmatpush1.bf16.msra.mxu0 0
  %265 = vmatprep.mubr.bf16.mxu0 0
  %266 = vmatmul.mubr.bf16.gmra.mrb[0].mxu0 %v231
  %v267 = vpop.f32.mrb[0].mxu0
  %v268 = vadd.f32 0.0, %v267
  %v269 = vpop.f32.mrb[0].mxu0
  %v270 = vpop.f32.mrb[0].mxu0
  %v271 = vadd.f32 0.0, %v270
  %v272 = vpop.f32.mrb[0].mxu0
  %273 = vdwg.mxu0
  %v274 = vld [vmem:[%s3] sm:$0xf]
  %v275 = vld [vmem:[%s3 + $0x4] sm:$0xf]
  %v276 = vunpack.c.l.bf16 %v274
  %v277 = vunpack.c.l.bf16 %v275
  %v278 = vld [vmem:[%s7] sm:$0x1]
  %280 = vset.pattern.permute.xlu0 0
  %281 = vperm.xlu0 %280, %v268
  %v282 = vpop.permute.xlu0 %281
  %285 = vset.pattern.permute.xlu0 0
  %286 = vperm.xlu0 %285, %v271
  %v287 = vpop.permute.xlu0 %286
  %v289 = vlaneseq
  %v290 = vshrl.u32 %v289, 7
  %v291 = vsub.s32 0, %v290
  %v292 = vrot.slane %v186, %v291
  %v293 = vadd.f32 %v282, %v292
  %v294 = vadd.f32 %v287, %v292
  %vm295 = vcmp.gt.f32.partialorder %v293, 0.0
  %vm296 = vcmp.gt.f32.partialorder %v294, 0.0
  %v297 = vmul.f32 %v293, 0.2
  %v298 = vmul.f32 %v294, 0.2
  %v299 = vsel %vm295, %v293, %v297
  %v300 = vsel %vm296, %v294, %v298
  %vm301 = vcmask 130048
  %v302 = vsel %vm301, %v299, -inf
  %303 = vmax.xlane.f32.xlu0 %v302
  %v304 = vpop.xlane.xlu0 %303
  %v305 = vsel %vm301, %v300, -inf
  %306 = vmax.xlane.f32.xlu0 %v305
  %v307 = vpop.xlane.xlu0 %306
  %v308 = vsub.f32 %v299, %v304
  %v309 = vsub.f32 %v300, %v307
  %v310 = vmul.f32 %v308, 1.442695
  %v311 = vpow.pop %v310
  %v312 = vmul.f32 %v309, 1.442695
  %v313 = vpow.pop %v312
  %v314 = vmul.f32 %v311, %v276
  %v315 = vmul.f32 %v313, %v277
  %v316 = vsel %vm301, %v314, 0.0
  %317 = vadd.xlane.f32.xlu0 %v316
  %v318 = vpop.xlane.xlu0 %317
  %v319 = vsel %vm301, %v315, 0.0
  %320 = vadd.xlane.f32.xlu0 %v319
  %v321 = vpop.xlane.xlu0 %320
  %v322 = vmax.f32 %v318, 1e-30
  %v323 = vmax.f32 %v321, 1e-30
  %v324 = vrcp.pop %v322
  %v325 = vrcp.pop %v323
  %v326 = vmul.f32 %v314, %v324
  %v327 = vmul.f32 %v315, %v325
  %v328 = vpack.c.bf16 %v327, %v326
  %v330 = vlaneseq
  %v331 = vshrl.u32 %v330, 7
  %v332 = vsub.s32 0, %v331
  %v333 = vrot.slane %v278, %v332
  %v336 = vsel %vm301, %v328, 0
  %338 = vmatprep.subr.bf16.mxu0 0
  %339 = vmatpush1.bf16.msra.mxu0 %v114
  %340 = vmatprep.subr.bf16.mxu0 0
  %341 = vmatpush1.bf16.msra.mxu0 0
  %342 = vmatprep.subr.bf16.mxu0 0
  %343 = vmatpush1.bf16.msra.mxu0 0
  %344 = vmatprep.subr.bf16.mxu0 0
  %345 = vmatpush1.bf16.msra.mxu0 0
  %346 = vmatprep.subr.bf16.mxu0 0
  %347 = vmatpush1.bf16.msra.mxu0 0
  %348 = vmatprep.subr.bf16.mxu0 0
  %349 = vmatpush1.bf16.msra.mxu0 0
  %350 = vmatprep.subr.bf16.mxu0 0
  %351 = vmatpush1.bf16.msra.mxu0 0
  %352 = vmatprep.subr.bf16.mxu0 0
  %353 = vmatpush1.bf16.msra.mxu0 0
  %354 = vmatprep.subr.bf16.mxu0 0
  %355 = vmatpush1.bf16.msra.mxu0 0
  %356 = vmatprep.subr.bf16.mxu0 0
  %357 = vmatpush1.bf16.msra.mxu0 0
  %358 = vmatprep.subr.bf16.mxu0 0
  %359 = vmatpush1.bf16.msra.mxu0 0
  %360 = vmatprep.subr.bf16.mxu0 0
  %361 = vmatpush1.bf16.msra.mxu0 0
  %362 = vmatprep.subr.bf16.mxu0 0
  %363 = vmatpush1.bf16.msra.mxu0 0
  %364 = vmatprep.subr.bf16.mxu0 0
  %365 = vmatpush1.bf16.msra.mxu0 0
  %366 = vmatprep.subr.bf16.mxu0 0
  %367 = vmatpush1.bf16.msra.mxu0 0
  %368 = vmatprep.subr.bf16.mxu0 0
  %369 = vmatpush1.bf16.msra.mxu0 0
  %370 = vmatprep.mubr.bf16.mxu0 0
  %371 = vmatmul.mubr.bf16.gmra.mrb[0].mxu0 %v336
  %v372 = vpop.f32.mrb[0].mxu0
  %v373 = vadd.f32 %v333, %v372
  %v374 = vpop.f32.mrb[0].mxu0
  %v375 = vpop.f32.mrb[0].mxu0
  %v376 = vadd.f32 %v333, %v375
  %v377 = vpop.f32.mrb[0].mxu0
  %378 = vdwg.mxu0
  %vm379 = vcmask 64512
  %380 = vst.msk [vmem:[%s8] sm:$0xff] %vm379, %v373
  %381 = vst.msk [vmem:[%s8 + $0x8] sm:$0xff] %vm379, %v376
  // Predicated region
  $region34: #{gat_forward.5} parent=0 // pred_check
    _
  $region35: #{gat_forward.5} parent=0 // pred_check_branch
    %383 = sbr.rel (0) target = $region37
  $region36: #{gat_forward.5} parent=0 // pred_region
    _
  $region37: #{gat_forward.5} parent=0 // pred_fallthru
    _
  // Predicated region
  $region38: #{gat_forward.5} parent=0 // pred_check
    _
  $region39: #{gat_forward.5} parent=0 // pred_check_branch
    %385 = sbr.rel (0) target = $region41
  $region40: #{gat_forward.5} parent=0 // pred_region
    _
  $region41: #{gat_forward.5} parent=0 // pred_fallthru
    _

// kernel: gat_forward.3
$region0: #{gat_forward.3}
  #allocation0 [shape = 'u32[]', space=smem, size = 0x4, offset = 0x4, fixed_abs, tag = 'smem constant byte address 0x4 - core index']
  #allocation1 [shape = 'u32[144,128]{1,0:T(1,128)}', space=vmem, size = 0x12000, scoped, tag = 'internal scratch']
  %s0 = inlined_call_operand.vmem [shape: bf16[16,16], index: 0, kind: input, shape index: {}, may-alias: {0,2}]
  %s1 = inlined_call_operand.vmem [shape: bf16[16,16], index: 1, kind: input, shape index: {}]
  %s2 = inlined_call_operand.vmem [shape: bf16[16,16], index: 2, kind: input, shape index: {}, may-alias: {0,2}]
  %s3 = inlined_call_operand.vmem [shape: bf16[16,16], index: 3, kind: input, shape index: {}]
  %s4 = inlined_call_operand.vmem [shape: bf16[16,64], index: 4, kind: input, shape index: {}]
  %s5 = inlined_call_operand.vmem [shape: bf16[4,16], index: 5, kind: input, shape index: {}]
  %s6 = inlined_call_operand.vmem [shape: bf16[16,4], index: 6, kind: input, shape index: {}]
  %s7 = inlined_call_operand.vmem [shape: f32[1,64], index: 7, kind: input, shape index: {}]
  %s8 = inlined_call_operand.vmem [shape: f32[16,64], index: 8, kind: output, shape index: {}]
  %s9 = sld [smem:[#allocation0]]
  $region42: #{gat_forward.3} parent=0
    _
  %s11 = ssub.s32 1, %s9
  %s12 = scalar_select 0, %s11, %s9
  // Predicated region
  $region2: #{gat_forward.3} parent=0 // pred_check
    _
  $region3: #{gat_forward.3} parent=0 // pred_check_branch
    %14 = sbr.rel (0) target = $region5
  $region4: #{gat_forward.3} parent=0 // pred_region
    _
  $region5: #{gat_forward.3} parent=0 // pred_fallthru
    _
  // Predicated region
  $region6: #{gat_forward.3} parent=0 // pred_check
    _
  $region7: #{gat_forward.3} parent=0 // pred_check_branch
    %16 = sbr.rel (0) target = $region9
  $region8: #{gat_forward.3} parent=0 // pred_region
    _
  $region9: #{gat_forward.3} parent=0 // pred_fallthru
    _
  // Predicated region
  $region10: #{gat_forward.3} parent=0 // pred_check
    _
  $region11: #{gat_forward.3} parent=0 // pred_check_branch
    %18 = sbr.rel (0) target = $region13
  $region12: #{gat_forward.3} parent=0 // pred_region
    _
  $region13: #{gat_forward.3} parent=0 // pred_fallthru
    _
  // Predicated region
  $region14: #{gat_forward.3} parent=0 // pred_check
    _
  $region15: #{gat_forward.3} parent=0 // pred_check_branch
    %20 = sbr.rel (0) target = $region17
  $region16: #{gat_forward.3} parent=0 // pred_region
    _
  $region17: #{gat_forward.3} parent=0 // pred_fallthru
    _
  // Predicated region
  $region18: #{gat_forward.3} parent=0 // pred_check
    _
  $region19: #{gat_forward.3} parent=0 // pred_check_branch
    %22 = sbr.rel (0) target = $region21
  $region20: #{gat_forward.3} parent=0 // pred_region
    _
  $region21: #{gat_forward.3} parent=0 // pred_fallthru
    _
  // Predicated region
  $region22: #{gat_forward.3} parent=0 // pred_check
    _
  $region23: #{gat_forward.3} parent=0 // pred_check_branch
    %24 = sbr.rel (0) target = $region25
  $region24: #{gat_forward.3} parent=0 // pred_region
    _
  $region25: #{gat_forward.3} parent=0 // pred_fallthru
    _
  // Predicated region
  $region26: #{gat_forward.3} parent=0 // pred_check
    _
  $region27: #{gat_forward.3} parent=0 // pred_check_branch
    %26 = sbr.rel (0) target = $region29
  $region28: #{gat_forward.3} parent=0 // pred_region
    _
  $region29: #{gat_forward.3} parent=0 // pred_fallthru
    _
  // Predicated region
  $region30: #{gat_forward.3} parent=0 // pred_check
    _
  $region31: #{gat_forward.3} parent=0 // pred_check_branch
    %28 = sbr.rel (0) target = $region33
  $region32: #{gat_forward.3} parent=0 // pred_region
    _
  $region33: #{gat_forward.3} parent=0 // pred_fallthru
    _
  %v30 = vld [vmem:[%s0] sm:$0xf]
  %v31 = vld [vmem:[%s0 + $0x4] sm:$0xf]
  %v32 = vld [vmem:[%s4] sm:$0xf]
  %v33 = vld [vmem:[%s4 + $0x4] sm:$0xf]
  %v36 = vunpack.c.l.b16 %v30
  %v37 = vunpack.c.l.b16 %v31
  %v38 = vpack.c.b16 %v37, %v36
  %v41 = vunpack.c.l.b16 %v32
  %v42 = vunpack.c.l.b16 %v33
  %v43 = vpack.c.b16 %v42, %v41
  %vm45 = vcmask 130048
  %v47 = vsel %vm45, %v38, 0
  %49 = vmatprep.subr.bf16.mxu0 0
  %50 = vmatpush1.bf16.msra.mxu0 %v43
  %51 = vmatprep.subr.bf16.mxu0 0
  %52 = vmatpush1.bf16.msra.mxu0 0
  %53 = vmatprep.subr.bf16.mxu0 0
  %54 = vmatpush1.bf16.msra.mxu0 0
  %55 = vmatprep.subr.bf16.mxu0 0
  %56 = vmatpush1.bf16.msra.mxu0 0
  %57 = vmatprep.subr.bf16.mxu0 0
  %58 = vmatpush1.bf16.msra.mxu0 0
  %59 = vmatprep.subr.bf16.mxu0 0
  %60 = vmatpush1.bf16.msra.mxu0 0
  %61 = vmatprep.subr.bf16.mxu0 0
  %62 = vmatpush1.bf16.msra.mxu0 0
  %63 = vmatprep.subr.bf16.mxu0 0
  %64 = vmatpush1.bf16.msra.mxu0 0
  %65 = vmatprep.subr.bf16.mxu0 0
  %66 = vmatpush1.bf16.msra.mxu0 0
  %67 = vmatprep.subr.bf16.mxu0 0
  %68 = vmatpush1.bf16.msra.mxu0 0
  %69 = vmatprep.subr.bf16.mxu0 0
  %70 = vmatpush1.bf16.msra.mxu0 0
  %71 = vmatprep.subr.bf16.mxu0 0
  %72 = vmatpush1.bf16.msra.mxu0 0
  %73 = vmatprep.subr.bf16.mxu0 0
  %74 = vmatpush1.bf16.msra.mxu0 0
  %75 = vmatprep.subr.bf16.mxu0 0
  %76 = vmatpush1.bf16.msra.mxu0 0
  %77 = vmatprep.subr.bf16.mxu0 0
  %78 = vmatpush1.bf16.msra.mxu0 0
  %79 = vmatprep.subr.bf16.mxu0 0
  %80 = vmatpush1.bf16.msra.mxu0 0
  %81 = vmatprep.mubr.bf16.mxu0 0
  %82 = vmatmul.mubr.bf16.gmra.mrb[0].mxu0 %v47
  %v83 = vpop.f32.mrb[0].mxu0
  %v84 = vadd.f32 0.0, %v83
  %v85 = vpop.f32.mrb[0].mxu0
  %v86 = vpop.f32.mrb[0].mxu0
  %v87 = vadd.f32 0.0, %v86
  %v88 = vpop.f32.mrb[0].mxu0
  %89 = vdwg.mxu0
  %v90 = vpack.c.bf16 %v87, %v84
  %v91 = vld [vmem:[%s5] sm:$0x3]
  %v92 = vld [vmem:[%s1] sm:$0xf]
  %v93 = vld [vmem:[%s1 + $0x4] sm:$0xf]
  %v96 = vunpack.c.l.b16 %v92
  %v97 = vunpack.c.l.b16 %v93
  %v98 = vpack.c.b16 %v97, %v96
  %v101 = vsel %vm45, %v91, 0
  %103 = vmatprep.subr.bf16.mxu0 0
  %104 = vmatpush1.bf16.msra.mxu0 %v98
  %105 = vmatprep.subr.bf16.mxu0 0
  %106 = vmatpush1.bf16.msra.mxu0 0
  %107 = vmatprep.subr.bf16.mxu0 0
  %108 = vmatpush1.bf16.msra.mxu0 0
  %109 = vmatprep.subr.bf16.mxu0 0
  %110 = vmatpush1.bf16.msra.mxu0 0
  %111 = vmatprep.subr.bf16.mxu0 0
  %112 = vmatpush1.bf16.msra.mxu0 0
  %113 = vmatprep.subr.bf16.mxu0 0
  %114 = vmatpush1.bf16.msra.mxu0 0
  %115 = vmatprep.subr.bf16.mxu0 0
  %116 = vmatpush1.bf16.msra.mxu0 0
  %117 = vmatprep.subr.bf16.mxu0 0
  %118 = vmatpush1.bf16.msra.mxu0 0
  %119 = vmatprep.subr.bf16.mxu0 0
  %120 = vmatpush1.bf16.msra.mxu0 0
  %121 = vmatprep.subr.bf16.mxu0 0
  %122 = vmatpush1.bf16.msra.mxu0 0
  %123 = vmatprep.subr.bf16.mxu0 0
  %124 = vmatpush1.bf16.msra.mxu0 0
  %125 = vmatprep.subr.bf16.mxu0 0
  %126 = vmatpush1.bf16.msra.mxu0 0
  %127 = vmatprep.subr.bf16.mxu0 0
  %128 = vmatpush1.bf16.msra.mxu0 0
  %129 = vmatprep.subr.bf16.mxu0 0
  %130 = vmatpush1.bf16.msra.mxu0 0
  %131 = vmatprep.subr.bf16.mxu0 0
  %132 = vmatpush1.bf16.msra.mxu0 0
  %133 = vmatprep.subr.bf16.mxu0 0
  %134 = vmatpush1.bf16.msra.mxu0 0
  %135 = vmatprep.mubr.bf16.mxu0 0
  %136 = vmatmul.mubr.bf16.gmra.mrb[0].mxu0 %v101
  %v137 = vpop.f32.mrb[0].mxu0
  %v138 = vadd.f32 0.0, %v137
  %v139 = vpop.f32.mrb[0].mxu0
  %v140 = vpop.f32.mrb[0].mxu0
  %v141 = vpop.f32.mrb[0].mxu0
  %142 = vdwg.mxu0
  %v143 = vld [vmem:[%s2] sm:$0xf]
  %v144 = vld [vmem:[%s2 + $0x4] sm:$0xf]
  %v145 = vld [vmem:[%s6] sm:$0xf]
  %v146 = vld [vmem:[%s6 + $0x4] sm:$0xf]
  %v149 = vunpack.c.l.b16 %v143
  %v150 = vunpack.c.l.b16 %v144
  %v151 = vpack.c.b16 %v150, %v149
  %v154 = vunpack.c.l.b16 %v145
  %v155 = vunpack.c.l.b16 %v146
  %v156 = vpack.c.b16 %v155, %v154
  %v159 = vsel %vm45, %v151, 0
  %161 = vmatprep.subr.bf16.mxu0 0
  %162 = vmatpush1.bf16.msra.mxu0 %v156
  %163 = vmatprep.subr.bf16.mxu0 0
  %164 = vmatpush1.bf16.msra.mxu0 0
  %165 = vmatprep.subr.bf16.mxu0 0
  %166 = vmatpush1.bf16.msra.mxu0 0
  %167 = vmatprep.subr.bf16.mxu0 0
  %168 = vmatpush1.bf16.msra.mxu0 0
  %169 = vmatprep.subr.bf16.mxu0 0
  %170 = vmatpush1.bf16.msra.mxu0 0
  %171 = vmatprep.subr.bf16.mxu0 0
  %172 = vmatpush1.bf16.msra.mxu0 0
  %173 = vmatprep.subr.bf16.mxu0 0
  %174 = vmatpush1.bf16.msra.mxu0 0
  %175 = vmatprep.subr.bf16.mxu0 0
  %176 = vmatpush1.bf16.msra.mxu0 0
  %177 = vmatprep.subr.bf16.mxu0 0
  %178 = vmatpush1.bf16.msra.mxu0 0
  %179 = vmatprep.subr.bf16.mxu0 0
  %180 = vmatpush1.bf16.msra.mxu0 0
  %181 = vmatprep.subr.bf16.mxu0 0
  %182 = vmatpush1.bf16.msra.mxu0 0
  %183 = vmatprep.subr.bf16.mxu0 0
  %184 = vmatpush1.bf16.msra.mxu0 0
  %185 = vmatprep.subr.bf16.mxu0 0
  %186 = vmatpush1.bf16.msra.mxu0 0
  %187 = vmatprep.subr.bf16.mxu0 0
  %188 = vmatpush1.bf16.msra.mxu0 0
  %189 = vmatprep.subr.bf16.mxu0 0
  %190 = vmatpush1.bf16.msra.mxu0 0
  %191 = vmatprep.subr.bf16.mxu0 0
  %192 = vmatpush1.bf16.msra.mxu0 0
  %193 = vmatprep.mubr.bf16.mxu0 0
  %194 = vmatmul.mubr.bf16.gmra.mrb[0].mxu0 %v159
  %v195 = vpop.f32.mrb[0].mxu0
  %v196 = vadd.f32 0.0, %v195
  %v197 = vpop.f32.mrb[0].mxu0
  %v198 = vpop.f32.mrb[0].mxu0
  %v199 = vadd.f32 0.0, %v198
  %v200 = vpop.f32.mrb[0].mxu0
  %201 = vdwg.mxu0
  %v202 = vld [vmem:[%s3] sm:$0xf]
  %v203 = vld [vmem:[%s3 + $0x4] sm:$0xf]
  %v204 = vunpack.c.l.bf16 %v202
  %v205 = vunpack.c.l.bf16 %v203
  %v206 = vld [vmem:[%s7] sm:$0x1]
  %208 = vset.pattern.permute.xlu0 0
  %209 = vperm.xlu0 %208, %v196
  %v210 = vpop.permute.xlu0 %209
  %213 = vset.pattern.permute.xlu0 0
  %214 = vperm.xlu0 %213, %v199
  %v215 = vpop.permute.xlu0 %214
  %v217 = vlaneseq
  %v218 = vshrl.u32 %v217, 7
  %v219 = vsub.s32 0, %v218
  %v220 = vrot.slane %v138, %v219
  %v221 = vadd.f32 %v210, %v220
  %v222 = vadd.f32 %v215, %v220
  %vm223 = vcmp.gt.f32.partialorder %v221, 0.0
  %vm224 = vcmp.gt.f32.partialorder %v222, 0.0
  %v225 = vmul.f32 %v221, 0.2
  %v226 = vmul.f32 %v222, 0.2
  %v227 = vsel %vm223, %v221, %v225
  %v228 = vsel %vm224, %v222, %v226
  %v229 = vsel %vm45, %v227, -inf
  %230 = vmax.xlane.f32.xlu0 %v229
  %v231 = vpop.xlane.xlu0 %230
  %v232 = vsel %vm45, %v228, -inf
  %233 = vmax.xlane.f32.xlu0 %v232
  %v234 = vpop.xlane.xlu0 %233
  %v235 = vsub.f32 %v227, %v231
  %v236 = vsub.f32 %v228, %v234
  %v237 = vmul.f32 %v235, 1.442695
  %v238 = vpow.pop %v237
  %v239 = vmul.f32 %v236, 1.442695
  %v240 = vpow.pop %v239
  %v241 = vmul.f32 %v238, %v204
  %v242 = vmul.f32 %v240, %v205
  %v243 = vsel %vm45, %v241, 0.0
  %244 = vadd.xlane.f32.xlu0 %v243
  %v245 = vpop.xlane.xlu0 %244
  %v246 = vsel %vm45, %v242, 0.0
  %247 = vadd.xlane.f32.xlu0 %v246
  %v248 = vpop.xlane.xlu0 %247
  %v249 = vmax.f32 %v245, 1e-30
  %v250 = vmax.f32 %v248, 1e-30
  %v251 = vrcp.pop %v249
  %v252 = vrcp.pop %v250
  %v253 = vmul.f32 %v241, %v251
  %v254 = vmul.f32 %v242, %v252
  %v255 = vpack.c.bf16 %v254, %v253
  %v257 = vsel %vm45, %v255, 0
  %259 = vmatprep.subr.bf16.mxu0 0
  %260 = vmatpush1.bf16.msra.mxu0 %v90
  %261 = vmatprep.subr.bf16.mxu0 0
  %262 = vmatpush1.bf16.msra.mxu0 0
  %263 = vmatprep.subr.bf16.mxu0 0
  %264 = vmatpush1.bf16.msra.mxu0 0
  %265 = vmatprep.subr.bf16.mxu0 0
  %266 = vmatpush1.bf16.msra.mxu0 0
  %267 = vmatprep.subr.bf16.mxu0 0
  %268 = vmatpush1.bf16.msra.mxu0 0
  %269 = vmatprep.subr.bf16.mxu0 0
  %270 = vmatpush1.bf16.msra.mxu0 0
  %271 = vmatprep.subr.bf16.mxu0 0
  %272 = vmatpush1.bf16.msra.mxu0 0
  %273 = vmatprep.subr.bf16.mxu0 0
  %274 = vmatpush1.bf16.msra.mxu0 0
  %275 = vmatprep.subr.bf16.mxu0 0
  %276 = vmatpush1.bf16.msra.mxu0 0
  %277 = vmatprep.subr.bf16.mxu0 0
  %278 = vmatpush1.bf16.msra.mxu0 0
  %279 = vmatprep.subr.bf16.mxu0 0
  %280 = vmatpush1.bf16.msra.mxu0 0
  %281 = vmatprep.subr.bf16.mxu0 0
  %282 = vmatpush1.bf16.msra.mxu0 0
  %283 = vmatprep.subr.bf16.mxu0 0
  %284 = vmatpush1.bf16.msra.mxu0 0
  %285 = vmatprep.subr.bf16.mxu0 0
  %286 = vmatpush1.bf16.msra.mxu0 0
  %287 = vmatprep.subr.bf16.mxu0 0
  %288 = vmatpush1.bf16.msra.mxu0 0
  %289 = vmatprep.subr.bf16.mxu0 0
  %290 = vmatpush1.bf16.msra.mxu0 0
  %291 = vmatprep.mubr.bf16.mxu0 0
  %292 = vmatmul.mubr.bf16.gmra.mrb[0].mxu0 %v257
  %v293 = vpop.f32.mrb[0].mxu0
  %v294 = vadd.f32 0.0, %v293
  %v295 = vpop.f32.mrb[0].mxu0
  %v296 = vpop.f32.mrb[0].mxu0
  %v297 = vadd.f32 0.0, %v296
  %v298 = vpop.f32.mrb[0].mxu0
  %299 = vdwg.mxu0
  %300 = vset.pattern.permute.xlu0 1
  %301 = vperm.xlu0 %300, %v196
  %v302 = vpop.permute.xlu0 %301
  %304 = vset.pattern.permute.xlu0 1
  %305 = vperm.xlu0 %304, %v199
  %v306 = vpop.permute.xlu0 %305
  %v308 = vlaneseq
  %v309 = vshrl.u32 %v308, 7
  %v310 = vsub.s32 1, %v309
  %v311 = vrot.slane %v138, %v310
  %v312 = vadd.f32 %v302, %v311
  %v313 = vadd.f32 %v306, %v311
  %vm314 = vcmp.gt.f32.partialorder %v312, 0.0
  %vm315 = vcmp.gt.f32.partialorder %v313, 0.0
  %v316 = vmul.f32 %v312, 0.2
  %v317 = vmul.f32 %v313, 0.2
  %v318 = vsel %vm314, %v312, %v316
  %v319 = vsel %vm315, %v313, %v317
  %v320 = vsel %vm45, %v318, -inf
  %321 = vmax.xlane.f32.xlu0 %v320
  %v322 = vpop.xlane.xlu0 %321
  %v323 = vsel %vm45, %v319, -inf
  %324 = vmax.xlane.f32.xlu0 %v323
  %v325 = vpop.xlane.xlu0 %324
  %v326 = vsub.f32 %v318, %v322
  %v327 = vsub.f32 %v319, %v325
  %v328 = vmul.f32 %v326, 1.442695
  %v329 = vpow.pop %v328
  %v330 = vmul.f32 %v327, 1.442695
  %v331 = vpow.pop %v330
  %v332 = vmul.f32 %v329, %v204
  %v333 = vmul.f32 %v331, %v205
  %v334 = vsel %vm45, %v332, 0.0
  %335 = vadd.xlane.f32.xlu0 %v334
  %v336 = vpop.xlane.xlu0 %335
  %v337 = vsel %vm45, %v333, 0.0
  %338 = vadd.xlane.f32.xlu0 %v337
  %v339 = vpop.xlane.xlu0 %338
  %v340 = vmax.f32 %v336, 1e-30
  %v341 = vmax.f32 %v339, 1e-30
  %v342 = vrcp.pop %v340
  %v343 = vrcp.pop %v341
  %v344 = vmul.f32 %v332, %v342
  %v345 = vmul.f32 %v333, %v343
  %v346 = vpack.c.bf16 %v345, %v344
  %348 = vrot.lane.b32.xlu0 %v90, 112
  %v349 = vpop.permute.xlu0 %348
  %v352 = vsel %vm45, %v346, 0
  %354 = vmatprep.subr.bf16.mxu0 0
  %355 = vmatpush1.bf16.msra.mxu0 %v349
  %356 = vmatprep.subr.bf16.mxu0 0
  %357 = vmatpush1.bf16.msra.mxu0 0
  %358 = vmatprep.subr.bf16.mxu0 0
  %359 = vmatpush1.bf16.msra.mxu0 0
  %360 = vmatprep.subr.bf16.mxu0 0
  %361 = vmatpush1.bf16.msra.mxu0 0
  %362 = vmatprep.subr.bf16.mxu0 0
  %363 = vmatpush1.bf16.msra.mxu0 0
  %364 = vmatprep.subr.bf16.mxu0 0
  %365 = vmatpush1.bf16.msra.mxu0 0
  %366 = vmatprep.subr.bf16.mxu0 0
  %367 = vmatpush1.bf16.msra.mxu0 0
  %368 = vmatprep.subr.bf16.mxu0 0
  %369 = vmatpush1.bf16.msra.mxu0 0
  %370 = vmatprep.subr.bf16.mxu0 0
  %371 = vmatpush1.bf16.msra.mxu0 0
  %372 = vmatprep.subr.bf16.mxu0 0
  %373 = vmatpush1.bf16.msra.mxu0 0
  %374 = vmatprep.subr.bf16.mxu0 0
  %375 = vmatpush1.bf16.msra.mxu0 0
  %376 = vmatprep.subr.bf16.mxu0 0
  %377 = vmatpush1.bf16.msra.mxu0 0
  %378 = vmatprep.subr.bf16.mxu0 0
  %379 = vmatpush1.bf16.msra.mxu0 0
  %380 = vmatprep.subr.bf16.mxu0 0
  %381 = vmatpush1.bf16.msra.mxu0 0
  %382 = vmatprep.subr.bf16.mxu0 0
  %383 = vmatpush1.bf16.msra.mxu0 0
  %384 = vmatprep.subr.bf16.mxu0 0
  %385 = vmatpush1.bf16.msra.mxu0 0
  %386 = vmatprep.mubr.bf16.mxu0 0
  %387 = vmatmul.mubr.bf16.gmra.mrb[0].mxu0 %v352
  %v388 = vpop.f32.mrb[0].mxu0
  %v389 = vadd.f32 0.0, %v388
  %v390 = vpop.f32.mrb[0].mxu0
  %v391 = vpop.f32.mrb[0].mxu0
  %v392 = vadd.f32 0.0, %v391
  %v393 = vpop.f32.mrb[0].mxu0
  %394 = vdwg.mxu0
  %395 = vset.pattern.permute.xlu0 2
  %396 = vperm.xlu0 %395, %v196
  %v397 = vpop.permute.xlu0 %396
  %399 = vset.pattern.permute.xlu0 2
  %400 = vperm.xlu0 %399, %v199
  %v401 = vpop.permute.xlu0 %400
  %v403 = vlaneseq
  %v404 = vshrl.u32 %v403, 7
  %v405 = vsub.s32 2, %v404
  %v406 = vrot.slane %v138, %v405
  %v407 = vadd.f32 %v397, %v406
  %v408 = vadd.f32 %v401, %v406
  %vm409 = vcmp.gt.f32.partialorder %v407, 0.0
  %vm410 = vcmp.gt.f32.partialorder %v408, 0.0
  %v411 = vmul.f32 %v407, 0.2
  %v412 = vmul.f32 %v408, 0.2
  %v413 = vsel %vm409, %v407, %v411
  %v414 = vsel %vm410, %v408, %v412
  %v415 = vsel %vm45, %v413, -inf
  %416 = vmax.xlane.f32.xlu0 %v415
  %v417 = vpop.xlane.xlu0 %416
  %v418 = vsel %vm45, %v414, -inf
  %419 = vmax.xlane.f32.xlu0 %v418
  %v420 = vpop.xlane.xlu0 %419
  %v421 = vsub.f32 %v413, %v417
  %v422 = vsub.f32 %v414, %v420
  %v423 = vmul.f32 %v421, 1.442695
  %v424 = vpow.pop %v423
  %v425 = vmul.f32 %v422, 1.442695
  %v426 = vpow.pop %v425
  %v427 = vmul.f32 %v424, %v204
  %v428 = vmul.f32 %v426, %v205
  %v429 = vsel %vm45, %v427, 0.0
  %430 = vadd.xlane.f32.xlu0 %v429
  %v431 = vpop.xlane.xlu0 %430
  %v432 = vsel %vm45, %v428, 0.0
  %433 = vadd.xlane.f32.xlu0 %v432
  %v434 = vpop.xlane.xlu0 %433
  %v435 = vmax.f32 %v431, 1e-30
  %v436 = vmax.f32 %v434, 1e-30
  %v437 = vrcp.pop %v435
  %v438 = vrcp.pop %v436
  %v439 = vmul.f32 %v427, %v437
  %v440 = vmul.f32 %v428, %v438
  %v441 = vpack.c.bf16 %v440, %v439
  %442 = vrot.lane.b32.xlu0 %v90, 96
  %v443 = vpop.permute.xlu0 %442
  %v446 = vsel %vm45, %v441, 0
  %448 = vmatprep.subr.bf16.mxu0 0
  %449 = vmatpush1.bf16.msra.mxu0 %v443
  %450 = vmatprep.subr.bf16.mxu0 0
  %451 = vmatpush1.bf16.msra.mxu0 0
  %452 = vmatprep.subr.bf16.mxu0 0
  %453 = vmatpush1.bf16.msra.mxu0 0
  %454 = vmatprep.subr.bf16.mxu0 0
  %455 = vmatpush1.bf16.msra.mxu0 0
  %456 = vmatprep.subr.bf16.mxu0 0
  %457 = vmatpush1.bf16.msra.mxu0 0
  %458 = vmatprep.subr.bf16.mxu0 0
  %459 = vmatpush1.bf16.msra.mxu0 0
  %460 = vmatprep.subr.bf16.mxu0 0
  %461 = vmatpush1.bf16.msra.mxu0 0
  %462 = vmatprep.subr.bf16.mxu0 0
  %463 = vmatpush1.bf16.msra.mxu0 0
  %464 = vmatprep.subr.bf16.mxu0 0
  %465 = vmatpush1.bf16.msra.mxu0 0
  %466 = vmatprep.subr.bf16.mxu0 0
  %467 = vmatpush1.bf16.msra.mxu0 0
  %468 = vmatprep.subr.bf16.mxu0 0
  %469 = vmatpush1.bf16.msra.mxu0 0
  %470 = vmatprep.subr.bf16.mxu0 0
  %471 = vmatpush1.bf16.msra.mxu0 0
  %472 = vmatprep.subr.bf16.mxu0 0
  %473 = vmatpush1.bf16.msra.mxu0 0
  %474 = vmatprep.subr.bf16.mxu0 0
  %475 = vmatpush1.bf16.msra.mxu0 0
  %476 = vmatprep.subr.bf16.mxu0 0
  %477 = vmatpush1.bf16.msra.mxu0 0
  %478 = vmatprep.subr.bf16.mxu0 0
  %479 = vmatpush1.bf16.msra.mxu0 0
  %480 = vmatprep.mubr.bf16.mxu0 0
  %481 = vmatmul.mubr.bf16.gmra.mrb[0].mxu0 %v446
  %v482 = vpop.f32.mrb[0].mxu0
  %v483 = vadd.f32 0.0, %v482
  %v484 = vpop.f32.mrb[0].mxu0
  %v485 = vpop.f32.mrb[0].mxu0
  %v486 = vadd.f32 0.0, %v485
  %v487 = vpop.f32.mrb[0].mxu0
  %488 = vdwg.mxu0
  %489 = vset.pattern.permute.xlu0 3
  %490 = vperm.xlu0 %489, %v196
  %v491 = vpop.permute.xlu0 %490
  %493 = vset.pattern.permute.xlu0 3
  %494 = vperm.xlu0 %493, %v199
  %v495 = vpop.permute.xlu0 %494
  %v497 = vlaneseq
  %v498 = vshrl.u32 %v497, 7
  %v499 = vsub.s32 3, %v498
  %v500 = vrot.slane %v138, %v499
  %v501 = vadd.f32 %v491, %v500
  %v502 = vadd.f32 %v495, %v500
  %vm503 = vcmp.gt.f32.partialorder %v501, 0.0
  %vm504 = vcmp.gt.f32.partialorder %v502, 0.0
  %v505 = vmul.f32 %v501, 0.2
  %v506 = vmul.f32 %v502, 0.2
  %v507 = vsel %vm503, %v501, %v505
  %v508 = vsel %vm504, %v502, %v506
  %v509 = vsel %vm45, %v507, -inf
  %510 = vmax.xlane.f32.xlu0 %v509
  %v511 = vpop.xlane.xlu0 %510
  %v512 = vsel %vm45, %v508, -inf
  %513 = vmax.xlane.f32.xlu0 %v512
  %v514 = vpop.xlane.xlu0 %513
  %v515 = vsub.f32 %v507, %v511
  %v516 = vsub.f32 %v508, %v514
  %v517 = vmul.f32 %v515, 1.442695
  %v518 = vpow.pop %v517
  %v519 = vmul.f32 %v516, 1.442695
  %v520 = vpow.pop %v519
  %v521 = vmul.f32 %v518, %v204
  %v522 = vmul.f32 %v520, %v205
  %v523 = vsel %vm45, %v521, 0.0
  %524 = vadd.xlane.f32.xlu0 %v523
  %v525 = vpop.xlane.xlu0 %524
  %v526 = vsel %vm45, %v522, 0.0
  %527 = vadd.xlane.f32.xlu0 %v526
  %v528 = vpop.xlane.xlu0 %527
  %v529 = vmax.f32 %v525, 1e-30
  %v530 = vmax.f32 %v528, 1e-30
  %v531 = vrcp.pop %v529
  %v532 = vrcp.pop %v530
  %v533 = vmul.f32 %v521, %v531
  %v534 = vmul.f32 %v522, %v532
  %v535 = vpack.c.bf16 %v534, %v533
  %536 = vrot.lane.b32.xlu0 %v90, 80
  %v537 = vpop.permute.xlu0 %536
  %v540 = vsel %vm45, %v535, 0
  %542 = vmatprep.subr.bf16.mxu0 0
  %543 = vmatpush1.bf16.msra.mxu0 %v537
  %544 = vmatprep.subr.bf16.mxu0 0
  %545 = vmatpush1.bf16.msra.mxu0 0
  %546 = vmatprep.subr.bf16.mxu0 0
  %547 = vmatpush1.bf16.msra.mxu0 0
  %548 = vmatprep.subr.bf16.mxu0 0
  %549 = vmatpush1.bf16.msra.mxu0 0
  %550 = vmatprep.subr.bf16.mxu0 0
  %551 = vmatpush1.bf16.msra.mxu0 0
  %552 = vmatprep.subr.bf16.mxu0 0
  %553 = vmatpush1.bf16.msra.mxu0 0
  %554 = vmatprep.subr.bf16.mxu0 0
  %555 = vmatpush1.bf16.msra.mxu0 0
  %556 = vmatprep.subr.bf16.mxu0 0
  %557 = vmatpush1.bf16.msra.mxu0 0
  %558 = vmatprep.subr.bf16.mxu0 0
  %559 = vmatpush1.bf16.msra.mxu0 0
  %560 = vmatprep.subr.bf16.mxu0 0
  %561 = vmatpush1.bf16.msra.mxu0 0
  %562 = vmatprep.subr.bf16.mxu0 0
  %563 = vmatpush1.bf16.msra.mxu0 0
  %564 = vmatprep.subr.bf16.mxu0 0
  %565 = vmatpush1.bf16.msra.mxu0 0
  %566 = vmatprep.subr.bf16.mxu0 0
  %567 = vmatpush1.bf16.msra.mxu0 0
  %568 = vmatprep.subr.bf16.mxu0 0
  %569 = vmatpush1.bf16.msra.mxu0 0
  %570 = vmatprep.subr.bf16.mxu0 0
  %571 = vmatpush1.bf16.msra.mxu0 0
  %572 = vmatprep.subr.bf16.mxu0 0
  %573 = vmatpush1.bf16.msra.mxu0 0
  %574 = vmatprep.mubr.bf16.mxu0 0
  %575 = vmatmul.mubr.bf16.gmra.mrb[0].mxu0 %v540
  %v576 = vpop.f32.mrb[0].mxu0
  %v577 = vadd.f32 0.0, %v576
  %v578 = vpop.f32.mrb[0].mxu0
  %v579 = vpop.f32.mrb[0].mxu0
  %v580 = vadd.f32 0.0, %v579
  %v581 = vpop.f32.mrb[0].mxu0
  %582 = vdwg.mxu0
  %585 = vrot.lane.b32.xlu0 %v389, 16
  %v586 = vpop.permute.xlu0 %585
  %587 = vrot.lane.b32.xlu0 %v392, 16
  %v588 = vpop.permute.xlu0 %587
  %593 = vrot.lane.b32.xlu0 %v483, 32
  %v594 = vpop.permute.xlu0 %593
  %595 = vrot.lane.b32.xlu0 %v486, 32
  %v596 = vpop.permute.xlu0 %595
  %601 = vrot.lane.b32.xlu0 %v577, 48
  %v602 = vpop.permute.xlu0 %601
  %603 = vrot.lane.b32.xlu0 %v580, 48
  %v604 = vpop.permute.xlu0 %603
  %v607 = vsel %vm45, %v294, %v586
  %v608 = vsel %vm45, %v297, %v588
  %vm609 = vcmask 261120
  %v610 = vsel %vm609, %v607, %v594
  %v611 = vsel %vm609, %v608, %v596
  %vm612 = vcmask 392192
  %v613 = vsel %vm612, %v610, %v602
  %v614 = vsel %vm612, %v611, %v604
  %v616 = vlaneseq
  %v617 = vshrl.u32 %v616, 7
  %v618 = vsub.s32 0, %v617
  %v619 = vrot.slane %v206, %v618
  %v621 = vadd.f32 %v613, %v619
  %v622 = vadd.f32 %v614, %v619
  %vm623 = vcmp.gt.f32.partialorder %v621, 0.0
  %vm624 = vcmp.gt.f32.partialorder %v622, 0.0
  %v625 = vmin.f32 %v621, 0.0
  %v626 = vmin.f32 %v622, 0.0
  %v627 = vmul.f32 %v625, 1.442695
  %v628 = vpow.pop %v627
  %v629 = vmul.f32 %v626, 1.442695
  %v630 = vpow.pop %v629
  %v631 = vsub.f32 %v628, 1.0
  %v632 = vsub.f32 %v630, 1.0
  %v633 = vsel %vm623, %v621, %v631
  %v634 = vsel %vm624, %v622, %v632
  %vm635 = vcmask 523264
  %636 = vst.msk [vmem:[%s8] sm:$0xff] %vm635, %v633
  %637 = vst.msk [vmem:[%s8 + $0x8] sm:$0xff] %vm635, %v634
  // Predicated region
  $region34: #{gat_forward.3} parent=0 // pred_check
    _
  $region35: #{gat_forward.3} parent=0 // pred_check_branch
    %639 = sbr.rel (0) target = $region37
  $region36: #{gat_forward.3} parent=0 // pred_region
    _
  $region37: #{gat_forward.3} parent=0 // pred_fallthru
    _
  // Predicated region
  $region38: #{gat_forward.3} parent=0 // pred_check
    _
  $region39: #{gat_forward.3} parent=0 // pred_check_branch
    %641 = sbr.rel (0) target = $region41
  $region40: #{gat_forward.3} parent=0 // pred_region
    _
  $region41: #{gat_forward.3} parent=0 // pred_fallthru
    _

// kernel: gat_forward.4
$region0: #{gat_forward.4}
  #allocation0 [shape = 'u32[]', space=smem, size = 0x4, offset = 0x4, fixed_abs, tag = 'smem constant byte address 0x4 - core index']
  #allocation1 [shape = 'u32[144,128]{1,0:T(1,128)}', space=vmem, size = 0x12000, scoped, tag = 'internal scratch']
  %s0 = inlined_call_operand.vmem [shape: bf16[16,64], index: 0, kind: input, shape index: {}, may-alias: {0,2}]
  %s1 = inlined_call_operand.vmem [shape: bf16[64,16], index: 1, kind: input, shape index: {}]
  %s2 = inlined_call_operand.vmem [shape: bf16[16,64], index: 2, kind: input, shape index: {}, may-alias: {0,2}]
  %s3 = inlined_call_operand.vmem [shape: bf16[16,16], index: 3, kind: input, shape index: {}]
  %s4 = inlined_call_operand.vmem [shape: bf16[64,64], index: 4, kind: input, shape index: {}]
  %s5 = inlined_call_operand.vmem [shape: bf16[4,64], index: 5, kind: input, shape index: {}]
  %s6 = inlined_call_operand.vmem [shape: bf16[64,4], index: 6, kind: input, shape index: {}]
  %s7 = inlined_call_operand.vmem [shape: f32[1,64], index: 7, kind: input, shape index: {}]
  %s8 = inlined_call_operand.vmem [shape: f32[16,64], index: 8, kind: output, shape index: {}]
  %s9 = sld [smem:[#allocation0]]
  $region42: #{gat_forward.4} parent=0
    _
  %s11 = ssub.s32 1, %s9
  %s12 = scalar_select 0, %s11, %s9
  // Predicated region
  $region2: #{gat_forward.4} parent=0 // pred_check
    _
  $region3: #{gat_forward.4} parent=0 // pred_check_branch
    %14 = sbr.rel (0) target = $region5
  $region4: #{gat_forward.4} parent=0 // pred_region
    _
  $region5: #{gat_forward.4} parent=0 // pred_fallthru
    _
  // Predicated region
  $region6: #{gat_forward.4} parent=0 // pred_check
    _
  $region7: #{gat_forward.4} parent=0 // pred_check_branch
    %16 = sbr.rel (0) target = $region9
  $region8: #{gat_forward.4} parent=0 // pred_region
    _
  $region9: #{gat_forward.4} parent=0 // pred_fallthru
    _
  // Predicated region
  $region10: #{gat_forward.4} parent=0 // pred_check
    _
  $region11: #{gat_forward.4} parent=0 // pred_check_branch
    %18 = sbr.rel (0) target = $region13
  $region12: #{gat_forward.4} parent=0 // pred_region
    _
  $region13: #{gat_forward.4} parent=0 // pred_fallthru
    _
  // Predicated region
  $region14: #{gat_forward.4} parent=0 // pred_check
    _
  $region15: #{gat_forward.4} parent=0 // pred_check_branch
    %20 = sbr.rel (0) target = $region17
  $region16: #{gat_forward.4} parent=0 // pred_region
    _
  $region17: #{gat_forward.4} parent=0 // pred_fallthru
    _
  // Predicated region
  $region18: #{gat_forward.4} parent=0 // pred_check
    _
  $region19: #{gat_forward.4} parent=0 // pred_check_branch
    %22 = sbr.rel (0) target = $region21
  $region20: #{gat_forward.4} parent=0 // pred_region
    _
  $region21: #{gat_forward.4} parent=0 // pred_fallthru
    _
  // Predicated region
  $region22: #{gat_forward.4} parent=0 // pred_check
    _
  $region23: #{gat_forward.4} parent=0 // pred_check_branch
    %24 = sbr.rel (0) target = $region25
  $region24: #{gat_forward.4} parent=0 // pred_region
    _
  $region25: #{gat_forward.4} parent=0 // pred_fallthru
    _
  // Predicated region
  $region26: #{gat_forward.4} parent=0 // pred_check
    _
  $region27: #{gat_forward.4} parent=0 // pred_check_branch
    %26 = sbr.rel (0) target = $region29
  $region28: #{gat_forward.4} parent=0 // pred_region
    _
  $region29: #{gat_forward.4} parent=0 // pred_fallthru
    _
  // Predicated region
  $region30: #{gat_forward.4} parent=0 // pred_check
    _
  $region31: #{gat_forward.4} parent=0 // pred_check_branch
    %28 = sbr.rel (0) target = $region33
  $region32: #{gat_forward.4} parent=0 // pred_region
    _
  $region33: #{gat_forward.4} parent=0 // pred_fallthru
    _
  %v30 = vld [vmem:[%s0] sm:$0xf]
  %v31 = vld [vmem:[%s0 + $0x4] sm:$0xf]
  %v32 = vld [vmem:[%s4] sm:$0xf]
  %v33 = vld [vmem:[%s4 + $0x4] sm:$0xf]
  %v34 = vld [vmem:[%s4 + $0x8] sm:$0xf]
  %v35 = vld [vmem:[%s4 + $0xc] sm:$0xf]
  %v36 = vld [vmem:[%s4 + $0x10] sm:$0xf]
  %v37 = vld [vmem:[%s4 + $0x14] sm:$0xf]
  %v38 = vld [vmem:[%s4 + $0x18] sm:$0xf]
  %v39 = vld [vmem:[%s4 + $0x1c] sm:$0xf]
  %v42 = vunpack.c.l.b16 %v30
  %v43 = vunpack.c.l.b16 %v31
  %v44 = vpack.c.b16 %v43, %v42
  %v53 = vunpack.c.l.b16 %v32
  %v54 = vunpack.c.l.b16 %v33
  %v55 = vunpack.c.l.b16 %v34
  %v56 = vunpack.c.l.b16 %v35
  %v57 = vunpack.c.l.b16 %v36
  %v58 = vunpack.c.l.b16 %v37
  %v59 = vunpack.c.l.b16 %v38
  %v60 = vunpack.c.l.b16 %v39
  %v61 = vpack.c.b16 %v54, %v53
  %v62 = vpack.c.b16 %v56, %v55
  %v63 = vpack.c.b16 %v58, %v57
  %v64 = vpack.c.b16 %v60, %v59
  %vm69 = vcmask 523264
  %v71 = vsel %vm69, %v44, 0
  %73 = vmatprep.subr.bf16.mxu0 0
  %74 = vmatpush1.bf16.msra.mxu0 %v61
  %75 = vmatprep.subr.bf16.mxu0 0
  %76 = vmatpush1.bf16.msra.mxu0 %v62
  %77 = vmatprep.subr.bf16.mxu0 0
  %78 = vmatpush1.bf16.msra.mxu0 %v63
  %79 = vmatprep.subr.bf16.mxu0 0
  %80 = vmatpush1.bf16.msra.mxu0 %v64
  %81 = vmatprep.subr.bf16.mxu0 0
  %82 = vmatpush1.bf16.msra.mxu0 0
  %83 = vmatprep.subr.bf16.mxu0 0
  %84 = vmatpush1.bf16.msra.mxu0 0
  %85 = vmatprep.subr.bf16.mxu0 0
  %86 = vmatpush1.bf16.msra.mxu0 0
  %87 = vmatprep.subr.bf16.mxu0 0
  %88 = vmatpush1.bf16.msra.mxu0 0
  %89 = vmatprep.subr.bf16.mxu0 0
  %90 = vmatpush1.bf16.msra.mxu0 0
  %91 = vmatprep.subr.bf16.mxu0 0
  %92 = vmatpush1.bf16.msra.mxu0 0
  %93 = vmatprep.subr.bf16.mxu0 0
  %94 = vmatpush1.bf16.msra.mxu0 0
  %95 = vmatprep.subr.bf16.mxu0 0
  %96 = vmatpush1.bf16.msra.mxu0 0
  %97 = vmatprep.subr.bf16.mxu0 0
  %98 = vmatpush1.bf16.msra.mxu0 0
  %99 = vmatprep.subr.bf16.mxu0 0
  %100 = vmatpush1.bf16.msra.mxu0 0
  %101 = vmatprep.subr.bf16.mxu0 0
  %102 = vmatpush1.bf16.msra.mxu0 0
  %103 = vmatprep.subr.bf16.mxu0 0
  %104 = vmatpush1.bf16.msra.mxu0 0
  %105 = vmatprep.mubr.bf16.mxu0 0
  %106 = vmatmul.mubr.bf16.gmra.mrb[0].mxu0 %v71
  %v107 = vpop.f32.mrb[0].mxu0
  %v108 = vadd.f32 0.0, %v107
  %v109 = vpop.f32.mrb[0].mxu0
  %v110 = vpop.f32.mrb[0].mxu0
  %v111 = vadd.f32 0.0, %v110
  %v112 = vpop.f32.mrb[0].mxu0
  %113 = vdwg.mxu0
  %v114 = vpack.c.bf16 %v111, %v108
  %v115 = vld [vmem:[%s5] sm:$0x3]
  %v116 = vld [vmem:[%s1] sm:$0xf]
  %v117 = vld [vmem:[%s1 + $0x4] sm:$0xf]
  %v118 = vld [vmem:[%s1 + $0x8] sm:$0xf]
  %v119 = vld [vmem:[%s1 + $0xc] sm:$0xf]
  %v120 = vld [vmem:[%s1 + $0x10] sm:$0xf]
  %v121 = vld [vmem:[%s1 + $0x14] sm:$0xf]
  %v122 = vld [vmem:[%s1 + $0x18] sm:$0xf]
  %v123 = vld [vmem:[%s1 + $0x1c] sm:$0xf]
  %v132 = vunpack.c.l.b16 %v116
  %v133 = vunpack.c.l.b16 %v117
  %v134 = vunpack.c.l.b16 %v118
  %v135 = vunpack.c.l.b16 %v119
  %v136 = vunpack.c.l.b16 %v120
  %v137 = vunpack.c.l.b16 %v121
  %v138 = vunpack.c.l.b16 %v122
  %v139 = vunpack.c.l.b16 %v123
  %v140 = vpack.c.b16 %v133, %v132
  %v141 = vpack.c.b16 %v135, %v134
  %v142 = vpack.c.b16 %v137, %v136
  %v143 = vpack.c.b16 %v139, %v138
  %v149 = vsel %vm69, %v115, 0
  %151 = vmatprep.subr.bf16.mxu0 0
  %152 = vmatpush1.bf16.msra.mxu0 %v140
  %153 = vmatprep.subr.bf16.mxu0 0
  %154 = vmatpush1.bf16.msra.mxu0 %v141
  %155 = vmatprep.subr.bf16.mxu0 0
  %156 = vmatpush1.bf16.msra.mxu0 %v142
  %157 = vmatprep.subr.bf16.mxu0 0
  %158 = vmatpush1.bf16.msra.mxu0 %v143
  %159 = vmatprep.subr.bf16.mxu0 0
  %160 = vmatpush1.bf16.msra.mxu0 0
  %161 = vmatprep.subr.bf16.mxu0 0
  %162 = vmatpush1.bf16.msra.mxu0 0
  %163 = vmatprep.subr.bf16.mxu0 0
  %164 = vmatpush1.bf16.msra.mxu0 0
  %165 = vmatprep.subr.bf16.mxu0 0
  %166 = vmatpush1.bf16.msra.mxu0 0
  %167 = vmatprep.subr.bf16.mxu0 0
  %168 = vmatpush1.bf16.msra.mxu0 0
  %169 = vmatprep.subr.bf16.mxu0 0
  %170 = vmatpush1.bf16.msra.mxu0 0
  %171 = vmatprep.subr.bf16.mxu0 0
  %172 = vmatpush1.bf16.msra.mxu0 0
  %173 = vmatprep.subr.bf16.mxu0 0
  %174 = vmatpush1.bf16.msra.mxu0 0
  %175 = vmatprep.subr.bf16.mxu0 0
  %176 = vmatpush1.bf16.msra.mxu0 0
  %177 = vmatprep.subr.bf16.mxu0 0
  %178 = vmatpush1.bf16.msra.mxu0 0
  %179 = vmatprep.subr.bf16.mxu0 0
  %180 = vmatpush1.bf16.msra.mxu0 0
  %181 = vmatprep.subr.bf16.mxu0 0
  %182 = vmatpush1.bf16.msra.mxu0 0
  %183 = vmatprep.mubr.bf16.mxu0 0
  %184 = vmatmul.mubr.bf16.gmra.mrb[0].mxu0 %v149
  %v185 = vpop.f32.mrb[0].mxu0
  %v186 = vadd.f32 0.0, %v185
  %v187 = vpop.f32.mrb[0].mxu0
  %v188 = vpop.f32.mrb[0].mxu0
  %v189 = vpop.f32.mrb[0].mxu0
  %190 = vdwg.mxu0
  %v191 = vld [vmem:[%s2] sm:$0xf]
  %v192 = vld [vmem:[%s2 + $0x4] sm:$0xf]
  %v193 = vld [vmem:[%s6] sm:$0xf]
  %v194 = vld [vmem:[%s6 + $0x4] sm:$0xf]
  %v195 = vld [vmem:[%s6 + $0x8] sm:$0xf]
  %v196 = vld [vmem:[%s6 + $0xc] sm:$0xf]
  %v197 = vld [vmem:[%s6 + $0x10] sm:$0xf]
  %v198 = vld [vmem:[%s6 + $0x14] sm:$0xf]
  %v199 = vld [vmem:[%s6 + $0x18] sm:$0xf]
  %v200 = vld [vmem:[%s6 + $0x1c] sm:$0xf]
  %v203 = vunpack.c.l.b16 %v191
  %v204 = vunpack.c.l.b16 %v192
  %v205 = vpack.c.b16 %v204, %v203
  %v214 = vunpack.c.l.b16 %v193
  %v215 = vunpack.c.l.b16 %v194
  %v216 = vunpack.c.l.b16 %v195
  %v217 = vunpack.c.l.b16 %v196
  %v218 = vunpack.c.l.b16 %v197
  %v219 = vunpack.c.l.b16 %v198
  %v220 = vunpack.c.l.b16 %v199
  %v221 = vunpack.c.l.b16 %v200
  %v222 = vpack.c.b16 %v215, %v214
  %v223 = vpack.c.b16 %v217, %v216
  %v224 = vpack.c.b16 %v219, %v218
  %v225 = vpack.c.b16 %v221, %v220
  %v231 = vsel %vm69, %v205, 0
  %233 = vmatprep.subr.bf16.mxu0 0
  %234 = vmatpush1.bf16.msra.mxu0 %v222
  %235 = vmatprep.subr.bf16.mxu0 0
  %236 = vmatpush1.bf16.msra.mxu0 %v223
  %237 = vmatprep.subr.bf16.mxu0 0
  %238 = vmatpush1.bf16.msra.mxu0 %v224
  %239 = vmatprep.subr.bf16.mxu0 0
  %240 = vmatpush1.bf16.msra.mxu0 %v225
  %241 = vmatprep.subr.bf16.mxu0 0
  %242 = vmatpush1.bf16.msra.mxu0 0
  %243 = vmatprep.subr.bf16.mxu0 0
  %244 = vmatpush1.bf16.msra.mxu0 0
  %245 = vmatprep.subr.bf16.mxu0 0
  %246 = vmatpush1.bf16.msra.mxu0 0
  %247 = vmatprep.subr.bf16.mxu0 0
  %248 = vmatpush1.bf16.msra.mxu0 0
  %249 = vmatprep.subr.bf16.mxu0 0
  %250 = vmatpush1.bf16.msra.mxu0 0
  %251 = vmatprep.subr.bf16.mxu0 0
  %252 = vmatpush1.bf16.msra.mxu0 0
  %253 = vmatprep.subr.bf16.mxu0 0
  %254 = vmatpush1.bf16.msra.mxu0 0
  %255 = vmatprep.subr.bf16.mxu0 0
  %256 = vmatpush1.bf16.msra.mxu0 0
  %257 = vmatprep.subr.bf16.mxu0 0
  %258 = vmatpush1.bf16.msra.mxu0 0
  %259 = vmatprep.subr.bf16.mxu0 0
  %260 = vmatpush1.bf16.msra.mxu0 0
  %261 = vmatprep.subr.bf16.mxu0 0
  %262 = vmatpush1.bf16.msra.mxu0 0
  %263 = vmatprep.subr.bf16.mxu0 0
  %264 = vmatpush1.bf16.msra.mxu0 0
  %265 = vmatprep.mubr.bf16.mxu0 0
  %266 = vmatmul.mubr.bf16.gmra.mrb[0].mxu0 %v231
  %v267 = vpop.f32.mrb[0].mxu0
  %v268 = vadd.f32 0.0, %v267
  %v269 = vpop.f32.mrb[0].mxu0
  %v270 = vpop.f32.mrb[0].mxu0
  %v271 = vadd.f32 0.0, %v270
  %v272 = vpop.f32.mrb[0].mxu0
  %273 = vdwg.mxu0
  %v274 = vld [vmem:[%s3] sm:$0xf]
  %v275 = vld [vmem:[%s3 + $0x4] sm:$0xf]
  %v276 = vunpack.c.l.bf16 %v274
  %v277 = vunpack.c.l.bf16 %v275
  %v278 = vld [vmem:[%s7] sm:$0x1]
  %280 = vset.pattern.permute.xlu0 0
  %281 = vperm.xlu0 %280, %v268
  %v282 = vpop.permute.xlu0 %281
  %285 = vset.pattern.permute.xlu0 0
  %286 = vperm.xlu0 %285, %v271
  %v287 = vpop.permute.xlu0 %286
  %v289 = vlaneseq
  %v290 = vshrl.u32 %v289, 7
  %v291 = vsub.s32 0, %v290
  %v292 = vrot.slane %v186, %v291
  %v293 = vadd.f32 %v282, %v292
  %v294 = vadd.f32 %v287, %v292
  %vm295 = vcmp.gt.f32.partialorder %v293, 0.0
  %vm296 = vcmp.gt.f32.partialorder %v294, 0.0
  %v297 = vmul.f32 %v293, 0.2
  %v298 = vmul.f32 %v294, 0.2
  %v299 = vsel %vm295, %v293, %v297
  %v300 = vsel %vm296, %v294, %v298
  %vm301 = vcmask 130048
  %v302 = vsel %vm301, %v299, -inf
  %303 = vmax.xlane.f32.xlu0 %v302
  %v304 = vpop.xlane.xlu0 %303
  %v305 = vsel %vm301, %v300, -inf
  %306 = vmax.xlane.f32.xlu0 %v305
  %v307 = vpop.xlane.xlu0 %306
  %v308 = vsub.f32 %v299, %v304
  %v309 = vsub.f32 %v300, %v307
  %v310 = vmul.f32 %v308, 1.442695
  %v311 = vpow.pop %v310
  %v312 = vmul.f32 %v309, 1.442695
  %v313 = vpow.pop %v312
  %v314 = vmul.f32 %v311, %v276
  %v315 = vmul.f32 %v313, %v277
  %v316 = vsel %vm301, %v314, 0.0
  %317 = vadd.xlane.f32.xlu0 %v316
  %v318 = vpop.xlane.xlu0 %317
  %v319 = vsel %vm301, %v315, 0.0
  %320 = vadd.xlane.f32.xlu0 %v319
  %v321 = vpop.xlane.xlu0 %320
  %v322 = vmax.f32 %v318, 1e-30
  %v323 = vmax.f32 %v321, 1e-30
  %v324 = vrcp.pop %v322
  %v325 = vrcp.pop %v323
  %v326 = vmul.f32 %v314, %v324
  %v327 = vmul.f32 %v315, %v325
  %v328 = vpack.c.bf16 %v327, %v326
  %v330 = vsel %vm301, %v328, 0
  %332 = vmatprep.subr.bf16.mxu0 0
  %333 = vmatpush1.bf16.msra.mxu0 %v114
  %334 = vmatprep.subr.bf16.mxu0 0
  %335 = vmatpush1.bf16.msra.mxu0 0
  %336 = vmatprep.subr.bf16.mxu0 0
  %337 = vmatpush1.bf16.msra.mxu0 0
  %338 = vmatprep.subr.bf16.mxu0 0
  %339 = vmatpush1.bf16.msra.mxu0 0
  %340 = vmatprep.subr.bf16.mxu0 0
  %341 = vmatpush1.bf16.msra.mxu0 0
  %342 = vmatprep.subr.bf16.mxu0 0
  %343 = vmatpush1.bf16.msra.mxu0 0
  %344 = vmatprep.subr.bf16.mxu0 0
  %345 = vmatpush1.bf16.msra.mxu0 0
  %346 = vmatprep.subr.bf16.mxu0 0
  %347 = vmatpush1.bf16.msra.mxu0 0
  %348 = vmatprep.subr.bf16.mxu0 0
  %349 = vmatpush1.bf16.msra.mxu0 0
  %350 = vmatprep.subr.bf16.mxu0 0
  %351 = vmatpush1.bf16.msra.mxu0 0
  %352 = vmatprep.subr.bf16.mxu0 0
  %353 = vmatpush1.bf16.msra.mxu0 0
  %354 = vmatprep.subr.bf16.mxu0 0
  %355 = vmatpush1.bf16.msra.mxu0 0
  %356 = vmatprep.subr.bf16.mxu0 0
  %357 = vmatpush1.bf16.msra.mxu0 0
  %358 = vmatprep.subr.bf16.mxu0 0
  %359 = vmatpush1.bf16.msra.mxu0 0
  %360 = vmatprep.subr.bf16.mxu0 0
  %361 = vmatpush1.bf16.msra.mxu0 0
  %362 = vmatprep.subr.bf16.mxu0 0
  %363 = vmatpush1.bf16.msra.mxu0 0
  %364 = vmatprep.mubr.bf16.mxu0 0
  %365 = vmatmul.mubr.bf16.gmra.mrb[0].mxu0 %v330
  %v366 = vpop.f32.mrb[0].mxu0
  %v367 = vadd.f32 0.0, %v366
  %v368 = vpop.f32.mrb[0].mxu0
  %v369 = vpop.f32.mrb[0].mxu0
  %v370 = vadd.f32 0.0, %v369
  %v371 = vpop.f32.mrb[0].mxu0
  %372 = vdwg.mxu0
  %373 = vset.pattern.permute.xlu0 1
  %374 = vperm.xlu0 %373, %v268
  %v375 = vpop.permute.xlu0 %374
  %377 = vset.pattern.permute.xlu0 1
  %378 = vperm.xlu0 %377, %v271
  %v379 = vpop.permute.xlu0 %378
  %v381 = vlaneseq
  %v382 = vshrl.u32 %v381, 7
  %v383 = vsub.s32 1, %v382
  %v384 = vrot.slane %v186, %v383
  %v385 = vadd.f32 %v375, %v384
  %v386 = vadd.f32 %v379, %v384
  %vm387 = vcmp.gt.f32.partialorder %v385, 0.0
  %vm388 = vcmp.gt.f32.partialorder %v386, 0.0
  %v389 = vmul.f32 %v385, 0.2
  %v390 = vmul.f32 %v386, 0.2
  %v391 = vsel %vm387, %v385, %v389
  %v392 = vsel %vm388, %v386, %v390
  %v393 = vsel %vm301, %v391, -inf
  %394 = vmax.xlane.f32.xlu0 %v393
  %v395 = vpop.xlane.xlu0 %394
  %v396 = vsel %vm301, %v392, -inf
  %397 = vmax.xlane.f32.xlu0 %v396
  %v398 = vpop.xlane.xlu0 %397
  %v399 = vsub.f32 %v391, %v395
  %v400 = vsub.f32 %v392, %v398
  %v401 = vmul.f32 %v399, 1.442695
  %v402 = vpow.pop %v401
  %v403 = vmul.f32 %v400, 1.442695
  %v404 = vpow.pop %v403
  %v405 = vmul.f32 %v402, %v276
  %v406 = vmul.f32 %v404, %v277
  %v407 = vsel %vm301, %v405, 0.0
  %408 = vadd.xlane.f32.xlu0 %v407
  %v409 = vpop.xlane.xlu0 %408
  %v410 = vsel %vm301, %v406, 0.0
  %411 = vadd.xlane.f32.xlu0 %v410
  %v412 = vpop.xlane.xlu0 %411
  %v413 = vmax.f32 %v409, 1e-30
  %v414 = vmax.f32 %v412, 1e-30
  %v415 = vrcp.pop %v413
  %v416 = vrcp.pop %v414
  %v417 = vmul.f32 %v405, %v415
  %v418 = vmul.f32 %v406, %v416
  %v419 = vpack.c.bf16 %v418, %v417
  %421 = vrot.lane.b32.xlu0 %v114, 112
  %v422 = vpop.permute.xlu0 %421
  %v425 = vsel %vm301, %v419, 0
  %427 = vmatprep.subr.bf16.mxu0 0
  %428 = vmatpush1.bf16.msra.mxu0 %v422
  %429 = vmatprep.subr.bf16.mxu0 0
  %430 = vmatpush1.bf16.msra.mxu0 0
  %431 = vmatprep.subr.bf16.mxu0 0
  %432 = vmatpush1.bf16.msra.mxu0 0
  %433 = vmatprep.subr.bf16.mxu0 0
  %434 = vmatpush1.bf16.msra.mxu0 0
  %435 = vmatprep.subr.bf16.mxu0 0
  %436 = vmatpush1.bf16.msra.mxu0 0
  %437 = vmatprep.subr.bf16.mxu0 0
  %438 = vmatpush1.bf16.msra.mxu0 0
  %439 = vmatprep.subr.bf16.mxu0 0
  %440 = vmatpush1.bf16.msra.mxu0 0
  %441 = vmatprep.subr.bf16.mxu0 0
  %442 = vmatpush1.bf16.msra.mxu0 0
  %443 = vmatprep.subr.bf16.mxu0 0
  %444 = vmatpush1.bf16.msra.mxu0 0
  %445 = vmatprep.subr.bf16.mxu0 0
  %446 = vmatpush1.bf16.msra.mxu0 0
  %447 = vmatprep.subr.bf16.mxu0 0
  %448 = vmatpush1.bf16.msra.mxu0 0
  %449 = vmatprep.subr.bf16.mxu0 0
  %450 = vmatpush1.bf16.msra.mxu0 0
  %451 = vmatprep.subr.bf16.mxu0 0
  %452 = vmatpush1.bf16.msra.mxu0 0
  %453 = vmatprep.subr.bf16.mxu0 0
  %454 = vmatpush1.bf16.msra.mxu0 0
  %455 = vmatprep.subr.bf16.mxu0 0
  %456 = vmatpush1.bf16.msra.mxu0 0
  %457 = vmatprep.subr.bf16.mxu0 0
  %458 = vmatpush1.bf16.msra.mxu0 0
  %459 = vmatprep.mubr.bf16.mxu0 0
  %460 = vmatmul.mubr.bf16.gmra.mrb[0].mxu0 %v425
  %v461 = vpop.f32.mrb[0].mxu0
  %v462 = vadd.f32 0.0, %v461
  %v463 = vpop.f32.mrb[0].mxu0
  %v464 = vpop.f32.mrb[0].mxu0
  %v465 = vadd.f32 0.0, %v464
  %v466 = vpop.f32.mrb[0].mxu0
  %467 = vdwg.mxu0
  %468 = vset.pattern.permute.xlu0 2
  %469 = vperm.xlu0 %468, %v268
  %v470 = vpop.permute.xlu0 %469
  %472 = vset.pattern.permute.xlu0 2
  %473 = vperm.xlu0 %472, %v271
  %v474 = vpop.permute.xlu0 %473
  %v476 = vlaneseq
  %v477 = vshrl.u32 %v476, 7
  %v478 = vsub.s32 2, %v477
  %v479 = vrot.slane %v186, %v478
  %v480 = vadd.f32 %v470, %v479
  %v481 = vadd.f32 %v474, %v479
  %vm482 = vcmp.gt.f32.partialorder %v480, 0.0
  %vm483 = vcmp.gt.f32.partialorder %v481, 0.0
  %v484 = vmul.f32 %v480, 0.2
  %v485 = vmul.f32 %v481, 0.2
  %v486 = vsel %vm482, %v480, %v484
  %v487 = vsel %vm483, %v481, %v485
  %v488 = vsel %vm301, %v486, -inf
  %489 = vmax.xlane.f32.xlu0 %v488
  %v490 = vpop.xlane.xlu0 %489
  %v491 = vsel %vm301, %v487, -inf
  %492 = vmax.xlane.f32.xlu0 %v491
  %v493 = vpop.xlane.xlu0 %492
  %v494 = vsub.f32 %v486, %v490
  %v495 = vsub.f32 %v487, %v493
  %v496 = vmul.f32 %v494, 1.442695
  %v497 = vpow.pop %v496
  %v498 = vmul.f32 %v495, 1.442695
  %v499 = vpow.pop %v498
  %v500 = vmul.f32 %v497, %v276
  %v501 = vmul.f32 %v499, %v277
  %v502 = vsel %vm301, %v500, 0.0
  %503 = vadd.xlane.f32.xlu0 %v502
  %v504 = vpop.xlane.xlu0 %503
  %v505 = vsel %vm301, %v501, 0.0
  %506 = vadd.xlane.f32.xlu0 %v505
  %v507 = vpop.xlane.xlu0 %506
  %v508 = vmax.f32 %v504, 1e-30
  %v509 = vmax.f32 %v507, 1e-30
  %v510 = vrcp.pop %v508
  %v511 = vrcp.pop %v509
  %v512 = vmul.f32 %v500, %v510
  %v513 = vmul.f32 %v501, %v511
  %v514 = vpack.c.bf16 %v513, %v512
  %515 = vrot.lane.b32.xlu0 %v114, 96
  %v516 = vpop.permute.xlu0 %515
  %v519 = vsel %vm301, %v514, 0
  %521 = vmatprep.subr.bf16.mxu0 0
  %522 = vmatpush1.bf16.msra.mxu0 %v516
  %523 = vmatprep.subr.bf16.mxu0 0
  %524 = vmatpush1.bf16.msra.mxu0 0
  %525 = vmatprep.subr.bf16.mxu0 0
  %526 = vmatpush1.bf16.msra.mxu0 0
  %527 = vmatprep.subr.bf16.mxu0 0
  %528 = vmatpush1.bf16.msra.mxu0 0
  %529 = vmatprep.subr.bf16.mxu0 0
  %530 = vmatpush1.bf16.msra.mxu0 0
  %531 = vmatprep.subr.bf16.mxu0 0
  %532 = vmatpush1.bf16.msra.mxu0 0
  %533 = vmatprep.subr.bf16.mxu0 0
  %534 = vmatpush1.bf16.msra.mxu0 0
  %535 = vmatprep.subr.bf16.mxu0 0
  %536 = vmatpush1.bf16.msra.mxu0 0
  %537 = vmatprep.subr.bf16.mxu0 0
  %538 = vmatpush1.bf16.msra.mxu0 0
  %539 = vmatprep.subr.bf16.mxu0 0
  %540 = vmatpush1.bf16.msra.mxu0 0
  %541 = vmatprep.subr.bf16.mxu0 0
  %542 = vmatpush1.bf16.msra.mxu0 0
  %543 = vmatprep.subr.bf16.mxu0 0
  %544 = vmatpush1.bf16.msra.mxu0 0
  %545 = vmatprep.subr.bf16.mxu0 0
  %546 = vmatpush1.bf16.msra.mxu0 0
  %547 = vmatprep.subr.bf16.mxu0 0
  %548 = vmatpush1.bf16.msra.mxu0 0
  %549 = vmatprep.subr.bf16.mxu0 0
  %550 = vmatpush1.bf16.msra.mxu0 0
  %551 = vmatprep.subr.bf16.mxu0 0
  %552 = vmatpush1.bf16.msra.mxu0 0
  %553 = vmatprep.mubr.bf16.mxu0 0
  %554 = vmatmul.mubr.bf16.gmra.mrb[0].mxu0 %v519
  %v555 = vpop.f32.mrb[0].mxu0
  %v556 = vadd.f32 0.0, %v555
  %v557 = vpop.f32.mrb[0].mxu0
  %v558 = vpop.f32.mrb[0].mxu0
  %v559 = vadd.f32 0.0, %v558
  %v560 = vpop.f32.mrb[0].mxu0
  %561 = vdwg.mxu0
  %562 = vset.pattern.permute.xlu0 3
  %563 = vperm.xlu0 %562, %v268
  %v564 = vpop.permute.xlu0 %563
  %566 = vset.pattern.permute.xlu0 3
  %567 = vperm.xlu0 %566, %v271
  %v568 = vpop.permute.xlu0 %567
  %v570 = vlaneseq
  %v571 = vshrl.u32 %v570, 7
  %v572 = vsub.s32 3, %v571
  %v573 = vrot.slane %v186, %v572
  %v574 = vadd.f32 %v564, %v573
  %v575 = vadd.f32 %v568, %v573
  %vm576 = vcmp.gt.f32.partialorder %v574, 0.0
  %vm577 = vcmp.gt.f32.partialorder %v575, 0.0
  %v578 = vmul.f32 %v574, 0.2
  %v579 = vmul.f32 %v575, 0.2
  %v580 = vsel %vm576, %v574, %v578
  %v581 = vsel %vm577, %v575, %v579
  %v582 = vsel %vm301, %v580, -inf
  %583 = vmax.xlane.f32.xlu0 %v582
  %v584 = vpop.xlane.xlu0 %583
  %v585 = vsel %vm301, %v581, -inf
  %586 = vmax.xlane.f32.xlu0 %v585
  %v587 = vpop.xlane.xlu0 %586
  %v588 = vsub.f32 %v580, %v584
  %v589 = vsub.f32 %v581, %v587
  %v590 = vmul.f32 %v588, 1.442695
  %v591 = vpow.pop %v590
  %v592 = vmul.f32 %v589, 1.442695
  %v593 = vpow.pop %v592
  %v594 = vmul.f32 %v591, %v276
  %v595 = vmul.f32 %v593, %v277
  %v596 = vsel %vm301, %v594, 0.0
  %597 = vadd.xlane.f32.xlu0 %v596
  %v598 = vpop.xlane.xlu0 %597
  %v599 = vsel %vm301, %v595, 0.0
  %600 = vadd.xlane.f32.xlu0 %v599
  %v601 = vpop.xlane.xlu0 %600
  %v602 = vmax.f32 %v598, 1e-30
  %v603 = vmax.f32 %v601, 1e-30
  %v604 = vrcp.pop %v602
  %v605 = vrcp.pop %v603
  %v606 = vmul.f32 %v594, %v604
  %v607 = vmul.f32 %v595, %v605
  %v608 = vpack.c.bf16 %v607, %v606
  %609 = vrot.lane.b32.xlu0 %v114, 80
  %v610 = vpop.permute.xlu0 %609
  %v613 = vsel %vm301, %v608, 0
  %615 = vmatprep.subr.bf16.mxu0 0
  %616 = vmatpush1.bf16.msra.mxu0 %v610
  %617 = vmatprep.subr.bf16.mxu0 0
  %618 = vmatpush1.bf16.msra.mxu0 0
  %619 = vmatprep.subr.bf16.mxu0 0
  %620 = vmatpush1.bf16.msra.mxu0 0
  %621 = vmatprep.subr.bf16.mxu0 0
  %622 = vmatpush1.bf16.msra.mxu0 0
  %623 = vmatprep.subr.bf16.mxu0 0
  %624 = vmatpush1.bf16.msra.mxu0 0
  %625 = vmatprep.subr.bf16.mxu0 0
  %626 = vmatpush1.bf16.msra.mxu0 0
  %627 = vmatprep.subr.bf16.mxu0 0
  %628 = vmatpush1.bf16.msra.mxu0 0
  %629 = vmatprep.subr.bf16.mxu0 0
  %630 = vmatpush1.bf16.msra.mxu0 0
  %631 = vmatprep.subr.bf16.mxu0 0
  %632 = vmatpush1.bf16.msra.mxu0 0
  %633 = vmatprep.subr.bf16.mxu0 0
  %634 = vmatpush1.bf16.msra.mxu0 0
  %635 = vmatprep.subr.bf16.mxu0 0
  %636 = vmatpush1.bf16.msra.mxu0 0
  %637 = vmatprep.subr.bf16.mxu0 0
  %638 = vmatpush1.bf16.msra.mxu0 0
  %639 = vmatprep.subr.bf16.mxu0 0
  %640 = vmatpush1.bf16.msra.mxu0 0
  %641 = vmatprep.subr.bf16.mxu0 0
  %642 = vmatpush1.bf16.msra.mxu0 0
  %643 = vmatprep.subr.bf16.mxu0 0
  %644 = vmatpush1.bf16.msra.mxu0 0
  %645 = vmatprep.subr.bf16.mxu0 0
  %646 = vmatpush1.bf16.msra.mxu0 0
  %647 = vmatprep.mubr.bf16.mxu0 0
  %648 = vmatmul.mubr.bf16.gmra.mrb[0].mxu0 %v613
  %v649 = vpop.f32.mrb[0].mxu0
  %v650 = vadd.f32 0.0, %v649
  %v651 = vpop.f32.mrb[0].mxu0
  %v652 = vpop.f32.mrb[0].mxu0
  %v653 = vadd.f32 0.0, %v652
  %v654 = vpop.f32.mrb[0].mxu0
  %655 = vdwg.mxu0
  %658 = vrot.lane.b32.xlu0 %v462, 16
  %v659 = vpop.permute.xlu0 %658
  %660 = vrot.lane.b32.xlu0 %v465, 16
  %v661 = vpop.permute.xlu0 %660
  %666 = vrot.lane.b32.xlu0 %v556, 32
  %v667 = vpop.permute.xlu0 %666
  %668 = vrot.lane.b32.xlu0 %v559, 32
  %v669 = vpop.permute.xlu0 %668
  %674 = vrot.lane.b32.xlu0 %v650, 48
  %v675 = vpop.permute.xlu0 %674
  %676 = vrot.lane.b32.xlu0 %v653, 48
  %v677 = vpop.permute.xlu0 %676
  %v680 = vsel %vm301, %v367, %v659
  %v681 = vsel %vm301, %v370, %v661
  %vm682 = vcmask 261120
  %v683 = vsel %vm682, %v680, %v667
  %v684 = vsel %vm682, %v681, %v669
  %vm685 = vcmask 392192
  %v686 = vsel %vm685, %v683, %v675
  %v687 = vsel %vm685, %v684, %v677
  %v689 = vlaneseq
  %v690 = vshrl.u32 %v689, 7
  %v691 = vsub.s32 0, %v690
  %v692 = vrot.slane %v278, %v691
  %v694 = vadd.f32 %v686, %v692
  %v695 = vadd.f32 %v687, %v692
  %vm696 = vcmp.gt.f32.partialorder %v694, 0.0
  %vm697 = vcmp.gt.f32.partialorder %v695, 0.0
  %v698 = vmin.f32 %v694, 0.0
  %v699 = vmin.f32 %v695, 0.0
  %v700 = vmul.f32 %v698, 1.442695
  %v701 = vpow.pop %v700
  %v702 = vmul.f32 %v699, 1.442695
  %v703 = vpow.pop %v702
  %v704 = vsub.f32 %v701, 1.0
  %v705 = vsub.f32 %v703, 1.0
  %v706 = vsel %vm696, %v694, %v704
  %v707 = vsel %vm697, %v695, %v705
  %708 = vst.msk [vmem:[%s8] sm:$0xff] %vm69, %v706
  %709 = vst.msk [vmem:[%s8 + $0x8] sm:$0xff] %vm69, %v707
  // Predicated region
  $region34: #{gat_forward.4} parent=0 // pred_check
    _
  $region35: #{gat_forward.4} parent=0 // pred_check_branch
    %711 = sbr.rel (0) target = $region37
  $region36: #{gat_forward.4} parent=0 // pred_region
    _
  $region37: #{gat_forward.4} parent=0 // pred_fallthru
    _
  // Predicated region
  $region38: #{gat_forward.4} parent=0 // pred_check
    _
  $region39: #{gat_forward.4} parent=0 // pred_check_branch
    %713 = sbr.rel (0) target = $region41
  $region40: #{gat_forward.4} parent=0 // pred_region
    _
  $region41: #{gat_forward.4} parent=0 // pred_fallthru
    _

</llo_original>
